<compile_context>
chip_gen: v5e
topology: v5e:2x2
jax: 0.10.0
libtpu: 0.0.40
codegen_flags: <defaults>
</compile_context>

<pallas_src>
import functools

import jax
import jax.numpy as jnp
from jax import lax
from jax.experimental import pallas as pl
from jax.experimental.pallas import tpu as pltpu

LANE = 128


def _round_up(x, m):
    return (x + m - 1) // m * m


def _auto_tile_h(H, W, Cp, halo, vmem_budget, target=64):
    """Largest divisor of H (<= target) whose working set fits the budget."""
    row_bf16 = W * Cp * 2
    row_f32 = W * Cp * 4
    best = 1
    for th in range(1, H + 1):
        if H % th:
            continue
        if th > target:
            break
        th_ext = th + 2 * halo
        live = (2 * th_ext * row_bf16      # double-buffered bf16 input windows
                + 2 * th * row_f32         # double-buffered f32 output blocks
                + 8 * th_ext * row_bf16    # bf16 intermediates + im2col taps
                + 2 * th_ext * row_f32)    # f32 matmul accumulators / BN temps
        if live <= int(0.6 * vmem_budget):
            best = th
    return best


def _make_kernel(W, Cp, TH, halo, dil, n_tiles, H_img, split_k):
    R1 = TH + 2 * dil            # rows of h1/h2 actually consumed downstream
    th_ext = TH + 2 * halo
    bf = jnp.bfloat16

    def mm3(a_m, a_c, a_p, w):
        # 3-tap factorized conv as MXU matmul(s): bf16 operands, f32 acc.
        R = a_m.shape[0]
        if split_k:
            # three K=Cp dots (v5e: 128-deep MXU, avoids the 3*Cp im2col copy)
            acc = jnp.dot(a_m.reshape(R * W, Cp), w[:Cp],
                          preferred_element_type=jnp.float32)
            acc += jnp.dot(a_c.reshape(R * W, Cp), w[Cp:2 * Cp],
                           preferred_element_type=jnp.float32)
            acc += jnp.dot(a_p.reshape(R * W, Cp), w[2 * Cp:],
                           preferred_element_type=jnp.float32)
        else:
            # one K=3*Cp dot (fills the 256-deep MXU of v6e/v7x)
            a = jnp.concatenate([a_m, a_c, a_p], axis=-1).reshape(R * W, 3 * Cp)
            acc = jnp.dot(a, w, preferred_element_type=jnp.float32)
        return acc.reshape(R, W, Cp)

    def conv_w(a, w, d):
        # 1x3 conv along W (zero padding), dilation d.
        R = a.shape[0]
        z = jnp.zeros((R, d, Cp), a.dtype)
        a_m = jnp.concatenate([z, a[:, :W - d]], axis=1)   # x[w - d]
        a_p = jnp.concatenate([a[:, d:], z], axis=1)       # x[w + d]
        return mm3(a_m, a, a_p, w)

    def kernel(x_hbm, w_ref, sb_ref, o_ref, xbuf, sem):
        b = pl.program_id(0)
        t = pl.program_id(1)
        slot = t % 2

        def start(tt, s):
            pltpu.make_async_copy(
                x_hbm.at[b, pl.ds(tt * TH, th_ext)],
                xbuf.at[s], sem.at[s]).start()

        @pl.when(t == 0)                  # prime this batch row's first window
        def _():
            start(0, 0)

        @pl.when(t + 1 < n_tiles)         # prefetch next window before waiting
        def _():
            start(t + 1, 1 - slot)

        pltpu.make_async_copy(
            x_hbm.at[b, pl.ds(t * TH, th_ext)],
            xbuf.at[slot], sem.at[slot]).wait()

        def bn_relu(acc, i):              # folded BN + ReLU in f32 on the VPU
            return jnp.maximum(acc * sb_ref[2 * i] + sb_ref[2 * i + 1], 0.0)

        x = xbuf[slot]                    # (th_ext, W, Cp) bf16

        # Conv(3x1, d=1)+BN+ReLU on the R1 rows consumed downstream; taps are
        # overlapping row-window slices (halo rows supply the zero padding).
        h = bn_relu(mm3(x[0:R1], x[1:1 + R1], x[2:2 + R1], w_ref[0]), 0)
        h = h.astype(bf)
        # Conv(1x3, d=1)+BN+ReLU.
        h = bn_relu(conv_w(h, w_ref[1], 1), 1).astype(bf)

        # Conv(3x1, dilated)+BN+ReLU for the TH center rows.  Rows of `h`
        # outside the image must act as zeros (the untiled conv zero-pads
        # conv2's *output*); mask them by absolute row index, folded into the
        # a_m / a_p im2col operands (no full-tile re-copy).
        row = lax.broadcasted_iota(jnp.int32, (TH, 1, 1), 0)
        a_m = jnp.where(t * TH + row >= dil, h[0:TH], 0)            # abs >= 0
        a_c = h[dil:dil + TH]
        a_p = jnp.where(t * TH + dil + row < H_img,
                        h[2 * dil:2 * dil + TH], 0)                 # abs < H
        h3 = bn_relu(mm3(a_m, a_c, a_p, w_ref[2]), 2).astype(bf)    # (TH,W,Cp)

        # Conv(1x3, dilated), no bias; keep the f32 accumulator.
        h4 = conv_w(h3, w_ref[3], dil)

        # Residual add + final BN + ReLU (f32).
        y = h4 + x[halo:halo + TH].astype(jnp.float32)
        o_ref[0] = jnp.maximum(y * sb_ref[6] + sb_ref[7], 0.0).astype(o_ref.dtype)

    return kernel


def non_bt1d_block(x_nchw, weights, scales, biases, *, dilation,
                   tile_h=None, split_k=False):
    """NonBt1DBlock forward.  x_nchw: (N,C,H,W) f32.  weights: 4 tensors of
    shape (3, C_in, C_out) (PyTorch taps reordered).  scales/biases: 4 folded
    inference-mode BatchNorm per-channel vectors (C,)."""
    N, C, H, W = x_nchw.shape
    assert 1 <= dilation < W, "dilation must be >= 1 and < W"
    Cp = _round_up(C, LANE)
    halo = dilation + 1              # 3x1(d=1) + 3x1(d=dil) receptive field

    # Per-generation VMEM budget (v7x: 64 MiB physical, v5e/v6e: 128 MiB).
    try:
        vmem_cap = pltpu.get_tpu_info().vmem_capacity_bytes
    except Exception:
        vmem_cap = 64 * 1024 * 1024
    vmem_limit = max(32 * 1024 * 1024,
                     min(int(vmem_cap * 0.75), 110 * 1024 * 1024))

    if tile_h is None:
        tile_h = _auto_tile_h(H, W, Cp, halo, vmem_limit)
    if H % tile_h != 0:              # keep the grid alive: largest divisor <= req
        tile_h = max(d for d in range(1, tile_h + 1) if H % d == 0)
    n_tiles = H // tile_h
    th_ext = tile_h + 2 * halo

    # ---- pack inputs (plain XLA; negligible next to the conv work) --------
    # Activations: NCHW f32 -> NHWC bf16, channels zero-padded to full lanes,
    # `halo` zero rows added once top/bottom (image zero padding for the 3x1
    # convs).  No overlapped tiles are materialized; the kernel DMAs each
    # halo'd row window straight out of this array.
    x = jnp.transpose(x_nchw, (0, 2, 3, 1)).astype(jnp.bfloat16)
    x = jnp.pad(x, ((0, 0), (halo, halo), (0, 0), (0, Cp - C)))
    # TODO(synk): in full ERFNet, keep activations NHWC / bf16 / Cp-padded
    # (and emit bf16 output) across consecutive blocks so this layout
    # conversion and the final slice/transpose happen once per network.

    # Conv weights: (3, C, C) -> zero-padded (3*Cp, Cp), four packed, bf16.
    def pack_w(w):
        wp = jnp.zeros((3, Cp, Cp), jnp.float32).at[:, :C, :C].set(w)
        return wp.reshape(3 * Cp, Cp)
    w_all = jnp.stack([pack_w(w) for w in weights]).astype(jnp.bfloat16)

    # Folded BN scale/bias pairs: (8, 1, 1, Cp) f32 (padded channels -> 0).
    sb = jnp.stack([jnp.pad(v, (0, Cp - C))
                    for pair in zip(scales, biases) for v in pair])
    sb = sb.reshape(8, 1, 1, Cp).astype(jnp.float32)

    # ---- pallas call -------------------------------------------------------
    kernel = _make_kernel(W, Cp, tile_h, halo, dilation, n_tiles, H, split_k)
    out = pl.pallas_call(
        kernel,
        out_shape=jax.ShapeDtypeStruct((N, H, W, Cp), jnp.float32),
        grid_spec=pltpu.PrefetchScalarGridSpec(
            num_scalar_prefetch=0,
            grid=(N, n_tiles),
            in_specs=[
                pl.BlockSpec(memory_space=pl.ANY),                    # x (HBM)
                pl.BlockSpec((4, 3 * Cp, Cp), lambda b, t: (0, 0, 0)),
                pl.BlockSpec((8, 1, 1, Cp), lambda b, t: (0, 0, 0, 0)),
            ],
            out_specs=pl.BlockSpec((1, tile_h, W, Cp),
                                   lambda b, t: (b, t, 0, 0)),
            scratch_shapes=[
                pltpu.VMEM((2, th_ext, W, Cp), jnp.bfloat16),  # DMA dbl-buffer
                pltpu.SemaphoreType.DMA((2,)),
            ],
        ),
        compiler_params=pltpu.CompilerParams(
            dimension_semantics=("parallel", "arbitrary"),
            vmem_limit_bytes=vmem_limit,
        ),
    )(x, w_all, sb)

    # ---- unpack: (N, H, W, Cp) -> (N, C, H, W) ------------------------------
    return jnp.transpose(out[..., :C], (0, 3, 1, 2))


# ----------------- pure-JAX references (PyTorch NCHW semantics) -------------

def _ref_forward(x, weights, scales, biases, dilation, match_kernel):
    """match_kernel=True mirrors the kernel's precision: bf16 conv operands,
    bf16 intermediate activations, f32 accumulation / BN math."""
    if match_kernel:
        md, prec = jnp.bfloat16, None
        x = x.astype(jnp.bfloat16).astype(jnp.float32)
        rnd = lambda a: a.astype(jnp.bfloat16).astype(jnp.float32)
    else:
        md, prec = jnp.float32, lax.Precision.HIGHEST
        rnd = lambda a: a

    def conv(a, w, kh, d):
        wt = jnp.transpose(w, (2, 1, 0))                 # (C_out, C_in, 3)
        wt = wt[:, :, :, None] if kh == 3 else wt[:, :, None, :]
        pad = ((d, d), (0, 0)) if kh == 3 else ((0, 0), (d, d))
        dil = (d, 1) if kh == 3 else (1, d)
        return lax.conv_general_dilated(
            a.astype(md), wt.astype(md), (1, 1), pad, rhs_dilation=dil,
            dimension_numbers=("NCHW", "OIHW", "NCHW"),
            preferred_element_type=jnp.float32, precision=prec)

    def bn_act(a, s, b):
        return jnp.maximum(
            a * s[None, :, None, None] + b[None, :, None, None], 0.0)

    r = x
    h = rnd(bn_act(conv(x, weights[0], 3, 1), scales[0], biases[0]))
    h = rnd(bn_act(conv(h, weights[1], 1, 1), scales[1], biases[1]))
    h = rnd(bn_act(conv(h, weights[2], 3, dilation), scales[2], biases[2]))
    h = conv(h, weights[3], 1, dilation)
    return bn_act(h + r, scales[3], biases[3])


if __name__ == "__main__":
    N, C, H, W = 2, 8, 16, 16

    key = jax.random.PRNGKey(0)
    k_x, k_w, k_bn = jax.random.split(key, 3)

    x_nchw = jax.random.normal(k_x, (N, C, H, W), jnp.float32)

    # conv weights stored as (tap, C_in, C_out)
    weights = tuple(0.2 * jax.random.normal(k, (3, C, C), jnp.float32)
                    for k in jax.random.split(k_w, 4))

    # four BatchNorms folded to inference-mode per-channel scale / bias
    eps = 1e-5
    scales, biases = [], []
    for i in range(4):
        kg, kb, km, kv = jax.random.split(jax.random.fold_in(k_bn, i), 4)
        gamma = 1.0 + 0.1 * jax.random.normal(kg, (C,), jnp.float32)
        beta = 0.1 * jax.random.normal(kb, (C,), jnp.float32)
        mean = 0.1 * jax.random.normal(km, (C,), jnp.float32)
        var = jnp.abs(jax.random.normal(kv, (C,), jnp.float32)) + 0.5
        s = gamma / jnp.sqrt(var + eps)
        scales.append(s)
        biases.append(beta - mean * s)
    scales, biases = tuple(scales), tuple(biases)

    # Three configs: multi-H-tile (exercises the manual halo DMA, prefetch and
    # boundary masking), auto single-tile, and the v5e-style split-K path.
    configs = ((2, 4, False), (1, None, False), (2, None, True))
    for dilation, tile_h, split_k in configs:
        run = jax.jit(functools.partial(non_bt1d_block, dilation=dilation,
                                        tile_h=tile_h, split_k=split_k))
        out = jax.block_until_ready(run(x_nchw, weights, scales, biases))
        assert out.shape == (N, C, H, W) and out.dtype == jnp.float32

        # Tight check vs a reference mirroring the kernel's bf16/f32 precision
        # -> validates tiling / halo DMA / boundary-mask logic.
        ref_m = _ref_forward(x_nchw, weights, scales, biases, dilation, True)
        err = float(jnp.max(jnp.abs(out - ref_m)))
        assert jnp.allclose(out, ref_m, rtol=1e-2, atol=1e-2), (dilation, err)

        # Sanity check vs the pure-f32 PyTorch forward (bf16 rounding only).
        ref_f = _ref_forward(x_nchw, weights, scales, biases, dilation, False)
        err32 = float(jnp.max(jnp.abs(out - ref_f)))
        assert jnp.allclose(out, ref_f, rtol=1e-1, atol=1e-1), (dilation, err32)

    print("KERNEL_OK")
</pallas_src>

<mosaic_0001>
module attributes {stable_mosaic.version = 11 : i64} {
  func.func @kernel(%arg0: i32, %arg1: i32, %arg2: memref<2x22x16x128xbf16, #tpu.memory_space<any>>, %arg3: memref<4x384x128xbf16, #tpu.memory_space<vmem>>, %arg4: memref<8x1x1x128xf32, #tpu.memory_space<vmem>>, %arg5: memref<1x4x16x128xf32, #tpu.memory_space<vmem>>, %arg6: memref<2x10x16x128xbf16, #tpu.memory_space<vmem>>, %arg7: memref<2x!tpu.dma_semaphore, #tpu.memory_space<semaphore_mem>>) attributes {dimension_semantics = [#tpu.dimension_semantics<parallel>, #tpu.dimension_semantics<arbitrary>], iteration_bounds = array<i64: 2, 4>, scalar_prefetch = 0 : i64, scratch_operands = 2 : i64, tpu.core_type = #tpu.core_type<tc>, window_params = [{}, {pipeline_mode = #tpu.pipeline_mode<synchronous>, transform_indices = @transform_1, window_bounds = array<i64: 4, 384, 128>}, {pipeline_mode = #tpu.pipeline_mode<synchronous>, transform_indices = @transform_2, window_bounds = array<i64: 8, 1, 1, 128>}, {transform_indices = @transform_3, window_bounds = array<i64: 1, 4, 16, 128>}]} {
    %c2_i32 = arith.constant 2 : i32
    %c0_i32 = arith.constant 0 : i32
    %0 = arith.cmpi eq, %c2_i32, %c0_i32 : i32
    %c1_i32 = arith.constant 1 : i32
    %1 = arith.select %0, %c1_i32, %c2_i32 : i32
    %2 = arith.remsi %arg1, %1 : i32
    %c0_i32_0 = arith.constant 0 : i32
    %3 = arith.cmpi ne, %2, %c0_i32_0 : i32
    %c0_i32_1 = arith.constant 0 : i32
    %4 = arith.cmpi slt, %2, %c0_i32_1 : i32
    %c0_i32_2 = arith.constant 0 : i32
    %5 = arith.cmpi slt, %1, %c0_i32_2 : i32
    %6 = arith.xori %4, %5 : i1
    %7 = arith.andi %6, %3 : i1
    %8 = arith.addi %2, %1 : i32
    %9 = arith.select %7, %8, %2 : i32
    %c0_i32_3 = arith.constant 0 : i32
    %10 = arith.cmpi eq, %arg1, %c0_i32_3 : i32
    %11 = arith.extui %10 : i1 to i32
    %c0_i32_4 = arith.constant 0 : i32
    %12 = arith.cmpi ne, %11, %c0_i32_4 : i32
    scf.if %12 {
      %c0_i32_71 = arith.constant 0 : i32
      %c0_i32_72 = arith.constant 0 : i32
      %c0_i32_73 = arith.constant 0 : i32
      %c0_i32_74 = arith.constant 0 : i32
      %c0_i32_75 = arith.constant 0 : i32
      %138 = tpu.memref_slice %arg2[%arg0, %c0_i32_73, %c0_i32_74, %c0_i32_75] : memref<2x22x16x128xbf16, #tpu.memory_space<any>> -> memref<1x10x16x128xbf16, #tpu.memory_space<any>>
      %139 = tpu.memref_squeeze %138 : memref<1x10x16x128xbf16, #tpu.memory_space<any>> -> memref<10x16x128xbf16, #tpu.memory_space<any>>
      %c0_i32_76 = arith.constant 0 : i32
      %c0_i32_77 = arith.constant 0 : i32
      %c0_i32_78 = arith.constant 0 : i32
      %140 = tpu.memref_slice %arg6[%c0_i32_71, %c0_i32_76, %c0_i32_77, %c0_i32_78] : memref<2x10x16x128xbf16, #tpu.memory_space<vmem>> -> memref<1x10x16x128xbf16, #tpu.memory_space<vmem>>
      %141 = tpu.memref_squeeze %140 : memref<1x10x16x128xbf16, #tpu.memory_space<vmem>> -> memref<10x16x128xbf16, #tpu.memory_space<vmem>>
      %142 = tpu.memref_slice %arg7[%c0_i32_72] : memref<2x!tpu.dma_semaphore, #tpu.memory_space<semaphore_mem>> -> memref<1x!tpu.dma_semaphore, #tpu.memory_space<semaphore_mem>>
      %143 = tpu.memref_squeeze %142 : memref<1x!tpu.dma_semaphore, #tpu.memory_space<semaphore_mem>> -> memref<!tpu.dma_semaphore, #tpu.memory_space<semaphore_mem>>
      tpu.enqueue_dma source(%139 : memref<10x16x128xbf16, #tpu.memory_space<any>>) target(%141 : memref<10x16x128xbf16, #tpu.memory_space<vmem>>) target_semaphore(%143 : memref<!tpu.dma_semaphore, #tpu.memory_space<semaphore_mem>>)
    } else {
    }
    %c1_i32_5 = arith.constant 1 : i32
    %13 = arith.addi %arg1, %c1_i32_5 : i32
    %c4_i32 = arith.constant 4 : i32
    %14 = arith.cmpi slt, %13, %c4_i32 : i32
    %15 = arith.extui %14 : i1 to i32
    %c0_i32_6 = arith.constant 0 : i32
    %16 = arith.cmpi ne, %15, %c0_i32_6 : i32
    scf.if %16 {
      %c1_i32_71 = arith.constant 1 : i32
      %138 = arith.addi %arg1, %c1_i32_71 : i32
      %c1_i32_72 = arith.constant 1 : i32
      %139 = arith.subi %c1_i32_72, %9 : i32
      %c4_i32_73 = arith.constant 4 : i32
      %140 = arith.muli %138, %c4_i32_73 : i32
      %c0_i32_74 = arith.constant 0 : i32
      %c0_i32_75 = arith.constant 0 : i32
      %141 = tpu.memref_slice %arg2[%arg0, %140, %c0_i32_74, %c0_i32_75] : memref<2x22x16x128xbf16, #tpu.memory_space<any>> -> memref<1x10x16x128xbf16, #tpu.memory_space<any>>
      %142 = tpu.memref_squeeze %141 : memref<1x10x16x128xbf16, #tpu.memory_space<any>> -> memref<10x16x128xbf16, #tpu.memory_space<any>>
      %c0_i32_76 = arith.constant 0 : i32
      %c0_i32_77 = arith.constant 0 : i32
      %c0_i32_78 = arith.constant 0 : i32
      %143 = tpu.memref_slice %arg6[%139, %c0_i32_76, %c0_i32_77, %c0_i32_78] : memref<2x10x16x128xbf16, #tpu.memory_space<vmem>> -> memref<1x10x16x128xbf16, #tpu.memory_space<vmem>>
      %144 = tpu.memref_squeeze %143 : memref<1x10x16x128xbf16, #tpu.memory_space<vmem>> -> memref<10x16x128xbf16, #tpu.memory_space<vmem>>
      %145 = tpu.memref_slice %arg7[%139] : memref<2x!tpu.dma_semaphore, #tpu.memory_space<semaphore_mem>> -> memref<1x!tpu.dma_semaphore, #tpu.memory_space<semaphore_mem>>
      %146 = tpu.memref_squeeze %145 : memref<1x!tpu.dma_semaphore, #tpu.memory_space<semaphore_mem>> -> memref<!tpu.dma_semaphore, #tpu.memory_space<semaphore_mem>>
      tpu.enqueue_dma source(%142 : memref<10x16x128xbf16, #tpu.memory_space<any>>) target(%144 : memref<10x16x128xbf16, #tpu.memory_space<vmem>>) target_semaphore(%146 : memref<!tpu.dma_semaphore, #tpu.memory_space<semaphore_mem>>)
    } else {
    }
    %c4_i32_7 = arith.constant 4 : i32
    %17 = arith.muli %arg1, %c4_i32_7 : i32
    %c0_i32_8 = arith.constant 0 : i32
    %c0_i32_9 = arith.constant 0 : i32
    %18 = tpu.memref_slice %arg2[%arg0, %17, %c0_i32_8, %c0_i32_9] : memref<2x22x16x128xbf16, #tpu.memory_space<any>> -> memref<1x10x16x128xbf16, #tpu.memory_space<any>>
    %19 = tpu.memref_squeeze %18 : memref<1x10x16x128xbf16, #tpu.memory_space<any>> -> memref<10x16x128xbf16, #tpu.memory_space<any>>
    %c0_i32_10 = arith.constant 0 : i32
    %c0_i32_11 = arith.constant 0 : i32
    %c0_i32_12 = arith.constant 0 : i32
    %20 = tpu.memref_slice %arg6[%9, %c0_i32_10, %c0_i32_11, %c0_i32_12] : memref<2x10x16x128xbf16, #tpu.memory_space<vmem>> -> memref<1x10x16x128xbf16, #tpu.memory_space<vmem>>
    %21 = tpu.memref_squeeze %20 : memref<1x10x16x128xbf16, #tpu.memory_space<vmem>> -> memref<10x16x128xbf16, #tpu.memory_space<vmem>>
    %22 = tpu.memref_slice %arg7[%9] : memref<2x!tpu.dma_semaphore, #tpu.memory_space<semaphore_mem>> -> memref<1x!tpu.dma_semaphore, #tpu.memory_space<semaphore_mem>>
    %23 = tpu.memref_squeeze %22 : memref<1x!tpu.dma_semaphore, #tpu.memory_space<semaphore_mem>> -> memref<!tpu.dma_semaphore, #tpu.memory_space<semaphore_mem>>
    tpu.wait_dma2 semaphore(%23 : memref<!tpu.dma_semaphore, #tpu.memory_space<semaphore_mem>>) src(%19 : memref<10x16x128xbf16, #tpu.memory_space<any>>) dst(%21 : memref<10x16x128xbf16, #tpu.memory_space<vmem>>)
    %24 = arith.index_cast %9 : i32 to index
    %c0 = arith.constant 0 : index
    %c0_13 = arith.constant 0 : index
    %c0_14 = arith.constant 0 : index
    %25 = vector.load %arg6[%24, %c0, %c0_13, %c0_14] : memref<2x10x16x128xbf16, #tpu.memory_space<vmem>>, vector<1x10x16x128xbf16>
    %26 = vector.shape_cast %25 : vector<1x10x16x128xbf16> to vector<10x16x128xbf16>
    %27 = vector.extract_strided_slice %26 {offsets = [0, 0, 0], sizes = [8, 16, 128], strides = [1, 1, 1]} : vector<10x16x128xbf16> to vector<8x16x128xbf16>
    %28 = vector.extract_strided_slice %26 {offsets = [1, 0, 0], sizes = [8, 16, 128], strides = [1, 1, 1]} : vector<10x16x128xbf16> to vector<8x16x128xbf16>
    %29 = vector.extract_strided_slice %26 {offsets = [2, 0, 0], sizes = [8, 16, 128], strides = [1, 1, 1]} : vector<10x16x128xbf16> to vector<8x16x128xbf16>
    %c0_15 = arith.constant 0 : index
    %c0_16 = arith.constant 0 : index
    %c0_17 = arith.constant 0 : index
    %30 = vector.load %arg3[%c0_15, %c0_16, %c0_17] : memref<4x384x128xbf16, #tpu.memory_space<vmem>>, vector<1x384x128xbf16>
    %31 = vector.shape_cast %30 : vector<1x384x128xbf16> to vector<384x128xbf16>
    %32 = tpu.concatenate %27, %28, %29 in 2 : vector<8x16x128xbf16>, vector<8x16x128xbf16>, vector<8x16x128xbf16> -> vector<8x16x384xbf16>
    %33 = vector.shape_cast %32 : vector<8x16x384xbf16> to vector<128x384xbf16>
    %cst = arith.constant dense<0.000000e+00> : vector<128x128xf32>
    %34 = tpu.matmul %33, %31, %cst {dimension_numbers = #tpu.dot_dimension_numbers<[1], [0], [0], [1], [0, 0, 1, 1], [], []>} : vector<128x384xbf16>, vector<384x128xbf16>, vector<128x128xf32> -> vector<128x128xf32>
    %35 = vector.shape_cast %34 : vector<128x128xf32> to vector<8x16x128xf32>
    %c0_18 = arith.constant 0 : index
    %c0_19 = arith.constant 0 : index
    %c0_20 = arith.constant 0 : index
    %c0_21 = arith.constant 0 : index
    %36 = vector.load %arg4[%c0_18, %c0_19, %c0_20, %c0_21] : memref<8x1x1x128xf32, #tpu.memory_space<vmem>>, vector<1x1x1x128xf32>
    %37 = vector.shape_cast %36 : vector<1x1x1x128xf32> to vector<1x1x128xf32>
    %38 = vector.broadcast %37 : vector<1x1x128xf32> to vector<8x16x128xf32>
    %39 = arith.mulf %35, %38 : vector<8x16x128xf32>
    %c1 = arith.constant 1 : index
    %c0_22 = arith.constant 0 : index
    %c0_23 = arith.constant 0 : index
    %c0_24 = arith.constant 0 : index
    %40 = vector.load %arg4[%c1, %c0_22, %c0_23, %c0_24] : memref<8x1x1x128xf32, #tpu.memory_space<vmem>>, vector<1x1x1x128xf32>
    %41 = vector.shape_cast %40 : vector<1x1x1x128xf32> to vector<1x1x128xf32>
    %42 = vector.broadcast %41 : vector<1x1x128xf32> to vector<8x16x128xf32>
    %43 = arith.addf %39, %42 : vector<8x16x128xf32>
    %cst_25 = arith.constant 0.000000e+00 : f32
    %44 = vector.broadcast %cst_25 : f32 to vector<8x16x128xf32>
    %45 = arith.maximumf %43, %44 : vector<8x16x128xf32>
    %46 = arith.truncf %45 : vector<8x16x128xf32> to vector<8x16x128xbf16>
    %c1_26 = arith.constant 1 : index
    %c0_27 = arith.constant 0 : index
    %c0_28 = arith.constant 0 : index
    %47 = vector.load %arg3[%c1_26, %c0_27, %c0_28] : memref<4x384x128xbf16, #tpu.memory_space<vmem>>, vector<1x384x128xbf16>
    %48 = vector.shape_cast %47 : vector<1x384x128xbf16> to vector<384x128xbf16>
    %cst_29 = arith.constant 0.000000e+00 : bf16
    %49 = vector.broadcast %cst_29 : bf16 to vector<8x1x128xbf16>
    %50 = vector.extract_strided_slice %46 {offsets = [0, 0, 0], sizes = [8, 15, 128], strides = [1, 1, 1]} : vector<8x16x128xbf16> to vector<8x15x128xbf16>
    %51 = tpu.concatenate %49, %50 in 1 : vector<8x1x128xbf16>, vector<8x15x128xbf16> -> vector<8x16x128xbf16>
    %52 = vector.extract_strided_slice %46 {offsets = [0, 1, 0], sizes = [8, 15, 128], strides = [1, 1, 1]} : vector<8x16x128xbf16> to vector<8x15x128xbf16>
    %53 = tpu.concatenate %52, %49 in 1 : vector<8x15x128xbf16>, vector<8x1x128xbf16> -> vector<8x16x128xbf16>
    %54 = tpu.concatenate %51, %46, %53 in 2 : vector<8x16x128xbf16>, vector<8x16x128xbf16>, vector<8x16x128xbf16> -> vector<8x16x384xbf16>
    %55 = vector.shape_cast %54 : vector<8x16x384xbf16> to vector<128x384xbf16>
    %cst_30 = arith.constant dense<0.000000e+00> : vector<128x128xf32>
    %56 = tpu.matmul %55, %48, %cst_30 {dimension_numbers = #tpu.dot_dimension_numbers<[1], [0], [0], [1], [0, 0, 1, 1], [], []>} : vector<128x384xbf16>, vector<384x128xbf16>, vector<128x128xf32> -> vector<128x128xf32>
    %57 = vector.shape_cast %56 : vector<128x128xf32> to vector<8x16x128xf32>
    %c2 = arith.constant 2 : index
    %c0_31 = arith.constant 0 : index
    %c0_32 = arith.constant 0 : index
    %c0_33 = arith.constant 0 : index
    %58 = vector.load %arg4[%c2, %c0_31, %c0_32, %c0_33] : memref<8x1x1x128xf32, #tpu.memory_space<vmem>>, vector<1x1x1x128xf32>
    %59 = vector.shape_cast %58 : vector<1x1x1x128xf32> to vector<1x1x128xf32>
    %60 = vector.broadcast %59 : vector<1x1x128xf32> to vector<8x16x128xf32>
    %61 = arith.mulf %57, %60 : vector<8x16x128xf32>
    %c3 = arith.constant 3 : index
    %c0_34 = arith.constant 0 : index
    %c0_35 = arith.constant 0 : index
    %c0_36 = arith.constant 0 : index
    %62 = vector.load %arg4[%c3, %c0_34, %c0_35, %c0_36] : memref<8x1x1x128xf32, #tpu.memory_space<vmem>>, vector<1x1x1x128xf32>
    %63 = vector.shape_cast %62 : vector<1x1x1x128xf32> to vector<1x1x128xf32>
    %64 = vector.broadcast %63 : vector<1x1x128xf32> to vector<8x16x128xf32>
    %65 = arith.addf %61, %64 : vector<8x16x128xf32>
    %cst_37 = arith.constant 0.000000e+00 : f32
    %66 = vector.broadcast %cst_37 : f32 to vector<8x16x128xf32>
    %67 = arith.maximumf %65, %66 : vector<8x16x128xf32>
    %68 = arith.truncf %67 : vector<8x16x128xf32> to vector<8x16x128xbf16>
    %69 = tpu.iota {dimensions = array<i32: 0>} : vector<4x1x1xi32>
    %c4_i32_38 = arith.constant 4 : i32
    %70 = arith.muli %arg1, %c4_i32_38 : i32
    %71 = vector.broadcast %70 : i32 to vector<4x1x1xi32>
    %72 = arith.addi %71, %69 : vector<4x1x1xi32>
    %c2_i32_39 = arith.constant 2 : i32
    %73 = vector.broadcast %c2_i32_39 : i32 to vector<4x1x1xi32>
    %74 = arith.cmpi sge, %72, %73 : vector<4x1x1xi32>
    %75 = vector.extract_strided_slice %68 {offsets = [0, 0, 0], sizes = [4, 16, 128], strides = [1, 1, 1]} : vector<8x16x128xbf16> to vector<4x16x128xbf16>
    %c0_i32_40 = arith.constant 0 : i32
    %76 = arith.sitofp %c0_i32_40 : i32 to bf16
    %77 = vector.shape_cast %74 : vector<4x1x1xi1> to vector<4x1x1xi1>
    %78 = vector.broadcast %77 : vector<4x1x1xi1> to vector<4x16x128xi1>
    %79 = vector.broadcast %76 : bf16 to vector<4x16x128xbf16>
    %80 = arith.select %78, %75, %79 : vector<4x16x128xi1>, vector<4x16x128xbf16>
    %81 = vector.extract_strided_slice %68 {offsets = [2, 0, 0], sizes = [4, 16, 128], strides = [1, 1, 1]} : vector<8x16x128xbf16> to vector<4x16x128xbf16>
    %c4_i32_41 = arith.constant 4 : i32
    %82 = arith.muli %arg1, %c4_i32_41 : i32
    %c2_i32_42 = arith.constant 2 : i32
    %83 = arith.addi %82, %c2_i32_42 : i32
    %84 = vector.broadcast %83 : i32 to vector<4x1x1xi32>
    %85 = arith.addi %84, %69 : vector<4x1x1xi32>
    %c16_i32 = arith.constant 16 : i32
    %86 = vector.broadcast %c16_i32 : i32 to vector<4x1x1xi32>
    %87 = arith.cmpi slt, %85, %86 : vector<4x1x1xi32>
    %88 = vector.extract_strided_slice %68 {offsets = [4, 0, 0], sizes = [4, 16, 128], strides = [1, 1, 1]} : vector<8x16x128xbf16> to vector<4x16x128xbf16>
    %c0_i32_43 = arith.constant 0 : i32
    %89 = arith.sitofp %c0_i32_43 : i32 to bf16
    %90 = vector.shape_cast %87 : vector<4x1x1xi1> to vector<4x1x1xi1>
    %91 = vector.broadcast %90 : vector<4x1x1xi1> to vector<4x16x128xi1>
    %92 = vector.broadcast %89 : bf16 to vector<4x16x128xbf16>
    %93 = arith.select %91, %88, %92 : vector<4x16x128xi1>, vector<4x16x128xbf16>
    %c2_44 = arith.constant 2 : index
    %c0_45 = arith.constant 0 : index
    %c0_46 = arith.constant 0 : index
    %94 = vector.load %arg3[%c2_44, %c0_45, %c0_46] : memref<4x384x128xbf16, #tpu.memory_space<vmem>>, vector<1x384x128xbf16>
    %95 = vector.shape_cast %94 : vector<1x384x128xbf16> to vector<384x128xbf16>
    %96 = tpu.concatenate %80, %81, %93 in 2 : vector<4x16x128xbf16>, vector<4x16x128xbf16>, vector<4x16x128xbf16> -> vector<4x16x384xbf16>
    %97 = vector.shape_cast %96 : vector<4x16x384xbf16> to vector<64x384xbf16>
    %cst_47 = arith.constant dense<0.000000e+00> : vector<64x128xf32>
    %98 = tpu.matmul %97, %95, %cst_47 {dimension_numbers = #tpu.dot_dimension_numbers<[1], [0], [0], [1], [0, 0, 1, 1], [], []>} : vector<64x384xbf16>, vector<384x128xbf16>, vector<64x128xf32> -> vector<64x128xf32>
    %99 = vector.shape_cast %98 : vector<64x128xf32> to vector<4x16x128xf32>
    %c4 = arith.constant 4 : index
    %c0_48 = arith.constant 0 : index
    %c0_49 = arith.constant 0 : index
    %c0_50 = arith.constant 0 : index
    %100 = vector.load %arg4[%c4, %c0_48, %c0_49, %c0_50] : memref<8x1x1x128xf32, #tpu.memory_space<vmem>>, vector<1x1x1x128xf32>
    %101 = vector.shape_cast %100 : vector<1x1x1x128xf32> to vector<1x1x128xf32>
    %102 = vector.broadcast %101 : vector<1x1x128xf32> to vector<4x16x128xf32>
    %103 = arith.mulf %99, %102 : vector<4x16x128xf32>
    %c5 = arith.constant 5 : index
    %c0_51 = arith.constant 0 : index
    %c0_52 = arith.constant 0 : index
    %c0_53 = arith.constant 0 : index
    %104 = vector.load %arg4[%c5, %c0_51, %c0_52, %c0_53] : memref<8x1x1x128xf32, #tpu.memory_space<vmem>>, vector<1x1x1x128xf32>
    %105 = vector.shape_cast %104 : vector<1x1x1x128xf32> to vector<1x1x128xf32>
    %106 = vector.broadcast %105 : vector<1x1x128xf32> to vector<4x16x128xf32>
    %107 = arith.addf %103, %106 : vector<4x16x128xf32>
    %cst_54 = arith.constant 0.000000e+00 : f32
    %108 = vector.broadcast %cst_54 : f32 to vector<4x16x128xf32>
    %109 = arith.maximumf %107, %108 : vector<4x16x128xf32>
    %110 = arith.truncf %109 : vector<4x16x128xf32> to vector<4x16x128xbf16>
    %c3_55 = arith.constant 3 : index
    %c0_56 = arith.constant 0 : index
    %c0_57 = arith.constant 0 : index
    %111 = vector.load %arg3[%c3_55, %c0_56, %c0_57] : memref<4x384x128xbf16, #tpu.memory_space<vmem>>, vector<1x384x128xbf16>
    %112 = vector.shape_cast %111 : vector<1x384x128xbf16> to vector<384x128xbf16>
    %cst_58 = arith.constant 0.000000e+00 : bf16
    %113 = vector.broadcast %cst_58 : bf16 to vector<4x2x128xbf16>
    %114 = vector.extract_strided_slice %110 {offsets = [0, 0, 0], sizes = [4, 14, 128], strides = [1, 1, 1]} : vector<4x16x128xbf16> to vector<4x14x128xbf16>
    %115 = tpu.concatenate %113, %114 in 1 : vector<4x2x128xbf16>, vector<4x14x128xbf16> -> vector<4x16x128xbf16>
    %116 = vector.extract_strided_slice %110 {offsets = [0, 2, 0], sizes = [4, 14, 128], strides = [1, 1, 1]} : vector<4x16x128xbf16> to vector<4x14x128xbf16>
    %117 = tpu.concatenate %116, %113 in 1 : vector<4x14x128xbf16>, vector<4x2x128xbf16> -> vector<4x16x128xbf16>
    %118 = tpu.concatenate %115, %110, %117 in 2 : vector<4x16x128xbf16>, vector<4x16x128xbf16>, vector<4x16x128xbf16> -> vector<4x16x384xbf16>
    %119 = vector.shape_cast %118 : vector<4x16x384xbf16> to vector<64x384xbf16>
    %cst_59 = arith.constant dense<0.000000e+00> : vector<64x128xf32>
    %120 = tpu.matmul %119, %112, %cst_59 {dimension_numbers = #tpu.dot_dimension_numbers<[1], [0], [0], [1], [0, 0, 1, 1], [], []>} : vector<64x384xbf16>, vector<384x128xbf16>, vector<64x128xf32> -> vector<64x128xf32>
    %121 = vector.shape_cast %120 : vector<64x128xf32> to vector<4x16x128xf32>
    %122 = vector.extract_strided_slice %26 {offsets = [3, 0, 0], sizes = [4, 16, 128], strides = [1, 1, 1]} : vector<10x16x128xbf16> to vector<4x16x128xbf16>
    %123 = arith.extf %122 : vector<4x16x128xbf16> to vector<4x16x128xf32>
    %124 = arith.addf %121, %123 : vector<4x16x128xf32>
    %c6 = arith.constant 6 : index
    %c0_60 = arith.constant 0 : index
    %c0_61 = arith.constant 0 : index
    %c0_62 = arith.constant 0 : index
    %125 = vector.load %arg4[%c6, %c0_60, %c0_61, %c0_62] : memref<8x1x1x128xf32, #tpu.memory_space<vmem>>, vector<1x1x1x128xf32>
    %126 = vector.shape_cast %125 : vector<1x1x1x128xf32> to vector<1x1x128xf32>
    %127 = vector.broadcast %126 : vector<1x1x128xf32> to vector<4x16x128xf32>
    %128 = arith.mulf %124, %127 : vector<4x16x128xf32>
    %c7 = arith.constant 7 : index
    %c0_63 = arith.constant 0 : index
    %c0_64 = arith.constant 0 : index
    %c0_65 = arith.constant 0 : index
    %129 = vector.load %arg4[%c7, %c0_63, %c0_64, %c0_65] : memref<8x1x1x128xf32, #tpu.memory_space<vmem>>, vector<1x1x1x128xf32>
    %130 = vector.shape_cast %129 : vector<1x1x1x128xf32> to vector<1x1x128xf32>
    %131 = vector.broadcast %130 : vector<1x1x128xf32> to vector<4x16x128xf32>
    %132 = arith.addf %128, %131 : vector<4x16x128xf32>
    %cst_66 = arith.constant 0.000000e+00 : f32
    %133 = vector.broadcast %cst_66 : f32 to vector<4x16x128xf32>
    %134 = arith.maximumf %132, %133 : vector<4x16x128xf32>
    %c0_67 = arith.constant 0 : index
    %c0_68 = arith.constant 0 : index
    %c0_69 = arith.constant 0 : index
    %c0_70 = arith.constant 0 : index
    %135 = vector.load %arg5[%c0_67, %c0_68, %c0_69, %c0_70] : memref<1x4x16x128xf32, #tpu.memory_space<vmem>>, vector<1x4x16x128xf32>
    %136 = vector.shape_cast %135 : vector<1x4x16x128xf32> to vector<4x16x128xf32>
    %137 = vector.shape_cast %134 : vector<4x16x128xf32> to vector<1x4x16x128xf32>
    tpu.vector_store %arg5[%c0_67, %c0_68, %c0_69, %c0_70], %137 {strides = array<i32>} : memref<1x4x16x128xf32, #tpu.memory_space<vmem>>, vector<1x4x16x128xf32>,
    return
  }
  func.func @transform_1(%arg0: i32, %arg1: i32) -> (i32, i32, i32) {
    %c0_i32 = arith.constant 0 : i32
    %c0_i32_0 = arith.constant 0 : i32
    %c0_i32_1 = arith.constant 0 : i32
    %c0_i32_2 = arith.constant 0 : i32
    return %c0_i32, %c0_i32_0, %c0_i32_1 : i32, i32, i32
  }
  func.func @transform_2(%arg0: i32, %arg1: i32) -> (i32, i32, i32, i32) {
    %c0_i32 = arith.constant 0 : i32
    %c0_i32_0 = arith.constant 0 : i32
    %c0_i32_1 = arith.constant 0 : i32
    %c0_i32_2 = arith.constant 0 : i32
    %c0_i32_3 = arith.constant 0 : i32
    return %c0_i32, %c0_i32_0, %c0_i32_1, %c0_i32_2 : i32, i32, i32, i32
  }
  func.func @transform_3(%arg0: i32, %arg1: i32) -> (i32, i32, i32, i32) {
    %c0_i32 = arith.constant 0 : i32
    %c0_i32_0 = arith.constant 0 : i32
    %c0_i32_1 = arith.constant 0 : i32
    return %arg0, %arg1, %c0_i32, %c0_i32_0 : i32, i32, i32, i32
  }
}

</mosaic_0001>

<llo_original>
// kernel: non_bt1d_block.1
$region0: #{non_bt1d_block.1}
  #allocation0 [shape = 'u32[]', space=smem, size = 0x4, offset = 0x4, fixed_abs, tag = 'smem constant byte address 0x4 - core index']
  #allocation1 [shape = 'u32[72,128]{1,0:T(1,128)}', space=vmem, size = 0x9000, scoped, tag = 'internal scratch']
  #allocation2 [shape = 'bf16[2,10,16,128]{3,2,1,0:T(8,128)(2,1)}', space=vmem, size = 0x14000, scoped, tag = 'scratch operand']
  #allocation3 [shape = 's32[2]{0}', space=sflag, size = 0x8, scoped, tag = 'scratch operand']
  #allocation4 [shape = 's32[]', space=sflag, size = 0x4, offset = 0, fixed_abs, tag = 'sflag constant byte address 0x0 - dummy sync flag']
  #allocation5 [shape = 's32[]', space=sflag, size = 0x4, offset = 0, fixed_abs, tag = 'sflag constant byte address 0x0 - dummy sync flag']
  %s0 = inlined_call_operand.vmem [shape: bf16[2,22,16,128], index: 0, kind: input, shape index: {}]
  %s1 = inlined_call_operand.vmem [shape: bf16[4,384,128], index: 1, kind: input, shape index: {}]
  %s2 = inlined_call_operand.vmem [shape: f32[8,1,1,128], index: 2, kind: input, shape index: {}]
  %s3 = inlined_call_operand.vmem [shape: f32[2,16,16,128], index: 3, kind: output, shape index: {}]
  %s4 = sld [smem:[#allocation0]]
  $region87: #{non_bt1d_block.1} parent=0
    _
  %s6 = ssub.s32 1, %s4
  %s7 = scalar_select 0, %s6, %s4
  loop: start=0, step=1, limit=10
  $region2: #{non_bt1d_block.1} parent=0 // loop_pre_header
    _
  $region3: #{non_bt1d_block.1} parent=0 // loop_header
    %s9 = sphi 0, %s13
    %p10 = scmp.ge.s32.totalorder %s9, 10
    %s16 = sphi 0, %s28
    %s17 = sphi 0, %s24
    %s18 = sphi 0, %s16
    %s19 = sphi 0, %s17
    %s20 = sphi 0, %s18
    %s21 = sphi 0, %s19
    %s29 = sphi 0, %s29
    %s31 = sphi 0, %s29
    %s32 = sphi 0, %s31
    %s46 = sphi 0, %s32
    %s50 = sphi 0, %s50
    %s52 = sphi 0, %s50
    %s53 = sphi 0, %s52
    %s67 = sphi 0, %s53
    %s75 = sphi 0, %s77
    %s78 = sphi 0, %s75
    %s79 = sphi 0, %s78
    %s95 = sphi 0, %s79
  $region4: #{non_bt1d_block.1} parent=0 // loop_header_branch
    %12 = sbr.rel (%p10) target = $region8
  $region5: #{non_bt1d_block.1} parent=0 // loop_body
    %s14 = ssub.s32 %s9, 1
    %s15 = ssub.s32 %s9, 2
    %s22 = sadd.s32 1, %s17
    %p23 = scmp.ge.s32.totalorder %s22, 4
    %s24 = scalar_select %p23, 0, %s22
    %s25 = sadd.s32 1, %s16
    %s26 = scalar_select %p23, %s25, %s16
    %p27 = scmp.ge.s32.totalorder %s26, 2
    %s28 = scalar_select %p27, 0, %s26
    %s30 = sadd.s32 %s29, 1
    %p33 = scmp.eq.s32.totalorder %s9, 7
    %p34 = scmp.ne.s32.totalorder %s29, %s31
    %p35 = scmp.eq.s32.totalorder %s9, 0
    %p36 = por %p34, %p35
    %p37 = scmp.ne.s32.totalorder %s29, %s31
    %p38 = scmp.eq.s32.totalorder %s14, 7
    %p39 = por %p37, %p38
    %p40 = scmp.ne.s32.totalorder %s31, %s32
    %p41 = scmp.eq.s32.totalorder %s14, 0
    %p42 = por %p40, %p41
    %p43 = scmp.ne.s32.totalorder %s31, %s32
    %p44 = scmp.eq.s32.totalorder %s15, 7
    %p45 = por %p43, %p44
    %p47 = scmp.ne.s32.totalorder %s32, %s46
    %p48 = scmp.eq.s32.totalorder %s15, 0
    %p49 = por %p47, %p48
    %s51 = sadd.s32 %s50, 1
    %p54 = scmp.eq.s32.totalorder %s9, 7
    %p55 = scmp.ne.s32.totalorder %s50, %s52
    %p56 = scmp.eq.s32.totalorder %s9, 0
    %p57 = por %p55, %p56
    %p58 = scmp.ne.s32.totalorder %s50, %s52
    %p59 = scmp.eq.s32.totalorder %s14, 7
    %p60 = por %p58, %p59
    %p61 = scmp.ne.s32.totalorder %s52, %s53
    %p62 = scmp.eq.s32.totalorder %s14, 0
    %p63 = por %p61, %p62
    %p64 = scmp.ne.s32.totalorder %s52, %s53
    %p65 = scmp.eq.s32.totalorder %s15, 7
    %p66 = por %p64, %p65
    %p68 = scmp.ne.s32.totalorder %s53, %s67
    %p69 = scmp.eq.s32.totalorder %s15, 0
    %p70 = por %p68, %p69
    %s71 = ssub.s32 %s16, %s28
    %s72 = ssub.s32 %s17, %s24
    %s73 = sor.u32 %s71, %s72
    %p74 = scmp.eq.s32.totalorder %s73, 0
    %s76 = sadd.s32 %s75, 1
    %s77 = scalar_select %p74, %s75, %s76
    %p80 = pneg %p74
    %p81 = scmp.eq.s32.totalorder %s9, 7
    %p82 = por %p80, %p81
    %p83 = scmp.ne.s32.totalorder %s75, %s78
    %p84 = scmp.eq.s32.totalorder %s9, 0
    %p85 = por %p83, %p84
    %p86 = scmp.ne.s32.totalorder %s75, %s78
    %p87 = scmp.eq.s32.totalorder %s14, 7
    %p88 = por %p86, %p87
    %p89 = scmp.ne.s32.totalorder %s78, %s79
    %p90 = scmp.eq.s32.totalorder %s14, 0
    %p91 = por %p89, %p90
    %p92 = scmp.ne.s32.totalorder %s78, %s79
    %p93 = scmp.eq.s32.totalorder %s15, 7
    %p94 = por %p92, %p93
    %p96 = scmp.ne.s32.totalorder %s79, %s95
    %p97 = scmp.eq.s32.totalorder %s15, 0
    %p98 = por %p96, %p97
    %p99 = scmp.le.s32.totalorder 1, %s9
    %p100 = scmp.lt.s32.totalorder %s9, 9
    %p101 = pnand %p99, %p100
    %p102 = pneg %p101
    // Predicated region
    $region9: #{non_bt1d_block.1} parent=5 // pred_check
      _
    $region10: #{non_bt1d_block.1} parent=5 // pred_check_branch
      %104 = sbr.rel (%p101) target = $region12
    $region11: #{non_bt1d_block.1} parent=5 // pred_region
      %s105 = ssub.s32 %s9, 1
      // Predicated region
      $region13: #{non_bt1d_block.1} parent=11 // pred_check
        %p106 = pneg %p42
      $region14: #{non_bt1d_block.1} parent=11 // pred_check_branch
        %108 = sbr.rel (%p106) target = $region16
      $region15: #{non_bt1d_block.1} parent=11 // pred_region
        _
      $region16: #{non_bt1d_block.1} parent=11 // pred_fallthru
        _
      // Predicated region
      $region17: #{non_bt1d_block.1} parent=11 // pred_check
        %p109 = pneg %p63
      $region18: #{non_bt1d_block.1} parent=11 // pred_check_branch
        %111 = sbr.rel (%p109) target = $region20
      $region19: #{non_bt1d_block.1} parent=11 // pred_region
        _
      $region20: #{non_bt1d_block.1} parent=11 // pred_fallthru
        _
    $region12: #{non_bt1d_block.1} parent=5 // pred_fallthru
      _
    %p112 = scmp.lt.s32.totalorder %s9, 8
    // Predicated region
    $region21: #{non_bt1d_block.1} parent=5 // pred_check
      %p113 = pneg %p112
    $region22: #{non_bt1d_block.1} parent=5 // pred_check_branch
      %115 = sbr.rel (%p113) target = $region24
    $region23: #{non_bt1d_block.1} parent=5 // pred_region
      _
    $region24: #{non_bt1d_block.1} parent=5 // pred_fallthru
      _
    %p116 = scmp.le.s32.totalorder 1, %s9
    %p117 = scmp.lt.s32.totalorder %s9, 9
    %p118 = pnand %p116, %p117
    %p119 = pneg %p118
    // Predicated region
    $region25: #{non_bt1d_block.1} parent=5 // pred_check
      _
    $region26: #{non_bt1d_block.1} parent=5 // pred_check_branch
      %121 = sbr.rel (%p118) target = $region28
    $region27: #{non_bt1d_block.1} parent=5 // pred_region
      %s122 = ssub.s32 %s9, 1
      %p123 = pneg %p42
      %p124 = pneg %p39
      %p125 = pneg %p63
      %p126 = pneg %p60
      %p127 = pneg %p91
      %p128 = pneg %p88
      %s129 = smul.u32 4, %s19
      %p130 = scmp.lt.s32.totalorder %s18, 1
      %s131 = scalar_select %p130, %s18, 1
      %p132 = scmp.lt.s32.totalorder %s129, 15
      %s133 = scalar_select %p132, %s129, 15
      %s134 = smul.addr %s133, 2
      %s135 = smul.addr %s131, 32
      %s136 = sadd.s32 %s134, %s135
      %s137 = smul.addr %s136, 8
      %s138 = scalar_lea.vmem %s3, %s137
      %s139 = smul.u32 4, %s19
      %p140 = scmp.lt.s32.totalorder %s18, 1
      %s141 = scalar_select %p140, %s18, 1
      %p142 = scmp.lt.s32.totalorder %s139, 15
      %s143 = scalar_select %p142, %s139, 15
      %s144 = smul.addr %s143, 2
      %s145 = smul.addr %s141, 32
      %s146 = sadd.s32 %s144, %s145
      %s147 = smul.addr %s146, 8
      %s148 = scalar_lea.vmem %s3, %s147
      %s149 = smul.u32 4, %s19
      %p151 = scmp.lt.s32.totalorder %s19, 0
      %s152 = ssub.s32 0, %s19
      %s153 = scalar_select %p151, %s152, %s19
      %s154 = sand.u32 %s153, 1
      %s155 = ssub.s32 0, %s154
      %s156 = scalar_select %p151, %s155, %s154
      %p157 = scmp.ne.s32.totalorder %s156, 0
      %p158 = scmp.lt.s32.totalorder %s156, 0
      %p159 = pnand %p158, %p157
      %p160 = pneg %p159
      %s161 = sadd.s32 %s156, 2
      %s162 = scalar_select %p160, %s161, %s156
      %p163 = scmp.eq.s32.totalorder %s19, 0
      // Predicated region
      $region29: #{non_bt1d_block.1} parent=27 // pred_check
        %p164 = pneg %p163
      $region30: #{non_bt1d_block.1} parent=27 // pred_check_branch
        %166 = sbr.rel (%p164) target = $region32
      $region31: #{non_bt1d_block.1} parent=27 // pred_region
        %s167 = smul.u32 %s18, 44
        %s168 = smul.addr %s167, 4
        %s169 = scalar_lea.vmem %s0, %s168
        // Predicated region
        $region33: #{non_bt1d_block.1} parent=31 // pred_check
          _
        $region34: #{non_bt1d_block.1} parent=31 // pred_check_branch
          %171 = sbr.rel (0) target = $region36
        $region35: #{non_bt1d_block.1} parent=31 // pred_region
          loop: start=0, step=1, limit=1
          $region37: #{non_bt1d_block.1} parent=35 // loop_pre_header
            _
          $region38: #{non_bt1d_block.1} parent=35 // loop_header
            %s173 = sphi 0, %s177
            %p174 = scmp.ge.s32.totalorder %s173, 1
            %s178 = sphi %s169, %s169
            %s179 = sphi [#allocation2], [#allocation2]
          $region39: #{non_bt1d_block.1} parent=35 // loop_header_branch
            %176 = sbr.rel (%p174) target = $region43
          $region40: #{non_bt1d_block.1} parent=35 // loop_body
            %v180 = vld [vmem:[%s178] sm:$0xff]
            %181 = vst [vmem:[%s179] sm:$0xff] %v180
            %v182 = vld [vmem:[%s178 + $0x8] sm:$0xff]
            %183 = vst [vmem:[%s179 + $0x8] sm:$0xff] %v182
            %v184 = vld [vmem:[%s178 + $0x10] sm:$0xff]
            %185 = vst [vmem:[%s179 + $0x10] sm:$0xff] %v184
            %v186 = vld [vmem:[%s178 + $0x18] sm:$0xff]
            %187 = vst [vmem:[%s179 + $0x18] sm:$0xff] %v186
            %v188 = vld [vmem:[%s178 + $0x20] sm:$0xff]
            %189 = vst [vmem:[%s179 + $0x20] sm:$0xff] %v188
            %v190 = vld [vmem:[%s178 + $0x28] sm:$0xff]
            %191 = vst [vmem:[%s179 + $0x28] sm:$0xff] %v190
            %v192 = vld [vmem:[%s178 + $0x30] sm:$0xff]
            %193 = vst [vmem:[%s179 + $0x30] sm:$0xff] %v192
            %v194 = vld [vmem:[%s178 + $0x38] sm:$0xff]
            %195 = vst [vmem:[%s179 + $0x38] sm:$0xff] %v194
            %v196 = vld [vmem:[%s178 + $0x40] sm:$0xff]
            %197 = vst [vmem:[%s179 + $0x40] sm:$0xff] %v196
            %v198 = vld [vmem:[%s178 + $0x48] sm:$0xff]
            %199 = vst [vmem:[%s179 + $0x48] sm:$0xff] %v198
          $region41: #{non_bt1d_block.1} parent=35 // loop_footer
            %s177 = sadd.s32 1, %s173
          $region42: #{non_bt1d_block.1} parent=35 // loop_footer_branch
            %172 = sbr.rel target = $region38
          $region43: #{non_bt1d_block.1} parent=35 // loop_exit
            _
        $region36: #{non_bt1d_block.1} parent=31 // pred_fallthru
          _
        // Predicated region
        $region44: #{non_bt1d_block.1} parent=31 // pred_check
          _
        $region45: #{non_bt1d_block.1} parent=31 // pred_check_branch
          %201 = sbr.rel target = $region47
        $region46: #{non_bt1d_block.1} parent=31 // pred_region
          _
        $region47: #{non_bt1d_block.1} parent=31 // pred_fallthru
          _
        // Predicated region
        $region48: #{non_bt1d_block.1} parent=31 // pred_check
          _
        $region49: #{non_bt1d_block.1} parent=31 // pred_check_branch
          %204 = sbr.rel (0) target = $region51
        $region50: #{non_bt1d_block.1} parent=31 // pred_region
          %205 = vsyncadd [#allocation3], 1280
        $region51: #{non_bt1d_block.1} parent=31 // pred_fallthru
          _
      $region32: #{non_bt1d_block.1} parent=27 // pred_fallthru
        _
      %s206 = sadd.s32 %s19, 1
      %p207 = scmp.lt.s32.totalorder %s206, 4
      // Predicated region
      $region52: #{non_bt1d_block.1} parent=27 // pred_check
        %p208 = pneg %p207
      $region53: #{non_bt1d_block.1} parent=27 // pred_check_branch
        %210 = sbr.rel (%p208) target = $region55
      $region54: #{non_bt1d_block.1} parent=27 // pred_region
        %s211 = ssub.s32 1, %s162
        %s212 = smul.u32 %s206, 4
        %s213 = smul.u32 %s212, 2
        %s214 = smul.u32 %s18, 44
        %s215 = sadd.s32 %s213, %s214
        %s216 = smul.addr %s215, 4
        %s217 = scalar_lea.vmem %s0, %s216
        %s218 = smul.u32 %s211, 20
        %s219 = smul.addr %s218, 4
        %s220 = scalar_lea.vmem [#allocation2], %s219
        %s221 = scalar_lea.sflag [#allocation3], %s211
        // Predicated region
        $region56: #{non_bt1d_block.1} parent=54 // pred_check
          _
        $region57: #{non_bt1d_block.1} parent=54 // pred_check_branch
          %223 = sbr.rel (0) target = $region59
        $region58: #{non_bt1d_block.1} parent=54 // pred_region
          loop: start=0, step=1, limit=1
          $region60: #{non_bt1d_block.1} parent=58 // loop_pre_header
            _
          $region61: #{non_bt1d_block.1} parent=58 // loop_header
            %s225 = sphi 0, %s229
            %p226 = scmp.ge.s32.totalorder %s225, 1
            %s230 = sphi %s217, %s217
            %s231 = sphi %s220, %s220
          $region62: #{non_bt1d_block.1} parent=58 // loop_header_branch
            %228 = sbr.rel (%p226) target = $region66
          $region63: #{non_bt1d_block.1} parent=58 // loop_body
            %v232 = vld [vmem:[%s230] sm:$0xff]
            %233 = vst [vmem:[%s231] sm:$0xff] %v232
            %v234 = vld [vmem:[%s230 + $0x8] sm:$0xff]
            %235 = vst [vmem:[%s231 + $0x8] sm:$0xff] %v234
            %v236 = vld [vmem:[%s230 + $0x10] sm:$0xff]
            %237 = vst [vmem:[%s231 + $0x10] sm:$0xff] %v236
            %v238 = vld [vmem:[%s230 + $0x18] sm:$0xff]
            %239 = vst [vmem:[%s231 + $0x18] sm:$0xff] %v238
            %v240 = vld [vmem:[%s230 + $0x20] sm:$0xff]
            %241 = vst [vmem:[%s231 + $0x20] sm:$0xff] %v240
            %v242 = vld [vmem:[%s230 + $0x28] sm:$0xff]
            %243 = vst [vmem:[%s231 + $0x28] sm:$0xff] %v242
            %v244 = vld [vmem:[%s230 + $0x30] sm:$0xff]
            %245 = vst [vmem:[%s231 + $0x30] sm:$0xff] %v244
            %v246 = vld [vmem:[%s230 + $0x38] sm:$0xff]
            %247 = vst [vmem:[%s231 + $0x38] sm:$0xff] %v246
            %v248 = vld [vmem:[%s230 + $0x40] sm:$0xff]
            %249 = vst [vmem:[%s231 + $0x40] sm:$0xff] %v248
            %v250 = vld [vmem:[%s230 + $0x48] sm:$0xff]
            %251 = vst [vmem:[%s231 + $0x48] sm:$0xff] %v250
          $region64: #{non_bt1d_block.1} parent=58 // loop_footer
            %s229 = sadd.s32 1, %s225
          $region65: #{non_bt1d_block.1} parent=58 // loop_footer_branch
            %224 = sbr.rel target = $region61
          $region66: #{non_bt1d_block.1} parent=58 // loop_exit
            _
        $region59: #{non_bt1d_block.1} parent=54 // pred_fallthru
          _
        // Predicated region
        $region67: #{non_bt1d_block.1} parent=54 // pred_check
          _
        $region68: #{non_bt1d_block.1} parent=54 // pred_check_branch
          %253 = sbr.rel target = $region70
        $region69: #{non_bt1d_block.1} parent=54 // pred_region
          _
        $region70: #{non_bt1d_block.1} parent=54 // pred_fallthru
          _
        // Predicated region
        $region71: #{non_bt1d_block.1} parent=54 // pred_check
          _
        $region72: #{non_bt1d_block.1} parent=54 // pred_check_branch
          %256 = sbr.rel (0) target = $region74
        $region73: #{non_bt1d_block.1} parent=54 // pred_region
          %257 = vsyncadd %s221, 1280
        $region74: #{non_bt1d_block.1} parent=54 // pred_fallthru
          _
      $region55: #{non_bt1d_block.1} parent=27 // pred_fallthru
        _
      %s258 = smul.u32 %s19, 4
      %s259 = smul.u32 %s162, 20
      %s260 = smul.addr %s259, 4
      %s261 = scalar_lea.vmem [#allocation2], %s260
      %s262 = scalar_lea.sflag [#allocation3], %s162
      %s263 = smul.u32 4, 10
      %s264 = smul.u32 %s263, 2
      %s265 = smul.u32 %s264, 1
      %s266 = sshll.u32 %s265, 4
      %267 = dma.done %s262, %s266
      %v268 = vld [vmem:[%s261] sm:$0xf]
      %v269 = vld [vmem:[%s261 + $0x4] sm:$0xf]
      %v270 = vld [vmem:[%s261 + $0x8] sm:$0xf]
      %v271 = vld [vmem:[%s261 + $0xc] sm:$0xf]
      %v272 = vld [vmem:[%s261 + $0x10] sm:$0xf]
      %v273 = vld [vmem:[%s261 + $0x14] sm:$0xf]
      %v274 = vld [vmem:[%s261 + $0x18] sm:$0xf]
      %v275 = vld [vmem:[%s261 + $0x1c] sm:$0xf]
      %v276 = vld [vmem:[%s261 + $0x20] sm:$0xf]
      %v277 = vld [vmem:[%s261 + $0x24] sm:$0xf]
      %v278 = vld [vmem:[%s261 + $0x28] sm:$0xf]
      %v279 = vld [vmem:[%s261 + $0x2c] sm:$0xf]
      %v280 = vld [vmem:[%s261 + $0x30] sm:$0xf]
      %v281 = vld [vmem:[%s261 + $0x34] sm:$0xf]
      %v282 = vld [vmem:[%s261 + $0x38] sm:$0xf]
      %v283 = vld [vmem:[%s261 + $0x3c] sm:$0xf]
      %v284 = vld [vmem:[%s261 + $0x40] sm:$0xf]
      %v285 = vld [vmem:[%s261 + $0x44] sm:$0xf]
      %v286 = vld [vmem:[%s261 + $0x48] sm:$0xf]
      %v287 = vld [vmem:[%s261 + $0x4c] sm:$0xf]
      %v288 = vld [vmem:[%s1] sm:$0xf]
      %v289 = vld [vmem:[%s1 + $0x4] sm:$0xf]
      %v290 = vld [vmem:[%s1 + $0x8] sm:$0xf]
      %v291 = vld [vmem:[%s1 + $0xc] sm:$0xf]
      %v292 = vld [vmem:[%s1 + $0x10] sm:$0xf]
      %v293 = vld [vmem:[%s1 + $0x14] sm:$0xf]
      %v294 = vld [vmem:[%s1 + $0x18] sm:$0xf]
      %v295 = vld [vmem:[%s1 + $0x1c] sm:$0xf]
      %v296 = vld [vmem:[%s1 + $0x20] sm:$0xf]
      %v297 = vld [vmem:[%s1 + $0x24] sm:$0xf]
      %v298 = vld [vmem:[%s1 + $0x28] sm:$0xf]
      %v299 = vld [vmem:[%s1 + $0x2c] sm:$0xf]
      %v300 = vld [vmem:[%s1 + $0x30] sm:$0xf]
      %v301 = vld [vmem:[%s1 + $0x34] sm:$0xf]
      %v302 = vld [vmem:[%s1 + $0x38] sm:$0xf]
      %v303 = vld [vmem:[%s1 + $0x3c] sm:$0xf]
      %v304 = vld [vmem:[%s1 + $0x40] sm:$0xf]
      %v305 = vld [vmem:[%s1 + $0x44] sm:$0xf]
      %v306 = vld [vmem:[%s1 + $0x48] sm:$0xf]
      %v307 = vld [vmem:[%s1 + $0x4c] sm:$0xf]
      %v308 = vld [vmem:[%s1 + $0x50] sm:$0xf]
      %v309 = vld [vmem:[%s1 + $0x54] sm:$0xf]
      %v310 = vld [vmem:[%s1 + $0x58] sm:$0xf]
      %v311 = vld [vmem:[%s1 + $0x5c] sm:$0xf]
      %v312 = vld [vmem:[%s1 + $0x60] sm:$0xf]
      %v313 = vld [vmem:[%s1 + $0x64] sm:$0xf]
      %v314 = vld [vmem:[%s1 + $0x68] sm:$0xf]
      %v315 = vld [vmem:[%s1 + $0x6c] sm:$0xf]
      %v316 = vld [vmem:[%s1 + $0x70] sm:$0xf]
      %v317 = vld [vmem:[%s1 + $0x74] sm:$0xf]
      %v318 = vld [vmem:[%s1 + $0x78] sm:$0xf]
      %v319 = vld [vmem:[%s1 + $0x7c] sm:$0xf]
      %v320 = vld [vmem:[%s1 + $0x80] sm:$0xf]
      %v321 = vld [vmem:[%s1 + $0x84] sm:$0xf]
      %v322 = vld [vmem:[%s1 + $0x88] sm:$0xf]
      %v323 = vld [vmem:[%s1 + $0x8c] sm:$0xf]
      %v324 = vld [vmem:[%s1 + $0x90] sm:$0xf]
      %v325 = vld [vmem:[%s1 + $0x94] sm:$0xf]
      %v326 = vld [vmem:[%s1 + $0x98] sm:$0xf]
      %v327 = vld [vmem:[%s1 + $0x9c] sm:$0xf]
      %v328 = vld [vmem:[%s1 + $0xa0] sm:$0xf]
      %v329 = vld [vmem:[%s1 + $0xa4] sm:$0xf]
      %v330 = vld [vmem:[%s1 + $0xa8] sm:$0xf]
      %v331 = vld [vmem:[%s1 + $0xac] sm:$0xf]
      %v332 = vld [vmem:[%s1 + $0xb0] sm:$0xf]
      %v333 = vld [vmem:[%s1 + $0xb4] sm:$0xf]
      %v334 = vld [vmem:[%s1 + $0xb8] sm:$0xf]
      %v335 = vld [vmem:[%s1 + $0xbc] sm:$0xf]
      %v352 = vunpack.c.l.b16 %v268
      %v353 = vunpack.c.l.b16 %v269
      %v354 = vunpack.c.l.b16 %v270
      %v355 = vunpack.c.l.b16 %v271
      %v356 = vunpack.c.l.b16 %v272
      %v357 = vunpack.c.l.b16 %v273
      %v358 = vunpack.c.l.b16 %v274
      %v359 = vunpack.c.l.b16 %v275
      %v360 = vunpack.c.l.b16 %v276
      %v361 = vunpack.c.l.b16 %v277
      %v362 = vunpack.c.l.b16 %v278
      %v363 = vunpack.c.l.b16 %v279
      %v364 = vunpack.c.l.b16 %v280
      %v365 = vunpack.c.l.b16 %v281
      %v366 = vunpack.c.l.b16 %v282
      %v367 = vunpack.c.l.b16 %v283
      %v368 = vpack.c.b16 %v353, %v352
      %v369 = vpack.c.b16 %v355, %v354
      %v370 = vpack.c.b16 %v357, %v356
      %v371 = vpack.c.b16 %v359, %v358
      %v372 = vpack.c.b16 %v361, %v360
      %v373 = vpack.c.b16 %v363, %v362
      %v374 = vpack.c.b16 %v365, %v364
      %v375 = vpack.c.b16 %v367, %v366
      %v386 = vunpack.c.l.b16 %v284
      %v387 = vunpack.c.l.b16 %v285
      %v388 = vpack.c.b16 %v387, %v386
      %v392 = vunpack.c.l.b16 %v286
      %v393 = vunpack.c.l.b16 %v287
      %v394 = vpack.c.b16 %v393, %v392
      %v444 = vunpack.c.l.b16 %v288
      %v445 = vunpack.c.l.b16 %v289
      %v446 = vunpack.c.l.b16 %v290
      %v447 = vunpack.c.l.b16 %v291
      %v448 = vunpack.c.l.b16 %v292
      %v449 = vunpack.c.l.b16 %v293
      %v450 = vunpack.c.l.b16 %v294
      %v451 = vunpack.c.l.b16 %v295
      %v452 = vunpack.c.l.b16 %v296
      %v453 = vunpack.c.l.b16 %v297
      %v454 = vunpack.c.l.b16 %v298
      %v455 = vunpack.c.l.b16 %v299
      %v456 = vunpack.c.l.b16 %v300
      %v457 = vunpack.c.l.b16 %v301
      %v458 = vunpack.c.l.b16 %v302
      %v459 = vunpack.c.l.b16 %v303
      %v460 = vunpack.c.l.b16 %v304
      %v461 = vunpack.c.l.b16 %v305
      %v462 = vunpack.c.l.b16 %v306
      %v463 = vunpack.c.l.b16 %v307
      %v464 = vunpack.c.l.b16 %v308
      %v465 = vunpack.c.l.b16 %v309
      %v466 = vunpack.c.l.b16 %v310
      %v467 = vunpack.c.l.b16 %v311
      %v468 = vunpack.c.l.b16 %v312
      %v469 = vunpack.c.l.b16 %v313
      %v470 = vunpack.c.l.b16 %v314
      %v471 = vunpack.c.l.b16 %v315
      %v472 = vunpack.c.l.b16 %v316
      %v473 = vunpack.c.l.b16 %v317
      %v474 = vunpack.c.l.b16 %v318
      %v475 = vunpack.c.l.b16 %v319
      %v476 = vunpack.c.l.b16 %v320
      %v477 = vunpack.c.l.b16 %v321
      %v478 = vunpack.c.l.b16 %v322
      %v479 = vunpack.c.l.b16 %v323
      %v480 = vunpack.c.l.b16 %v324
      %v481 = vunpack.c.l.b16 %v325
      %v482 = vunpack.c.l.b16 %v326
      %v483 = vunpack.c.l.b16 %v327
      %v484 = vunpack.c.l.b16 %v328
      %v485 = vunpack.c.l.b16 %v329
      %v486 = vunpack.c.l.b16 %v330
      %v487 = vunpack.c.l.b16 %v331
      %v488 = vunpack.c.l.b16 %v332
      %v489 = vunpack.c.l.b16 %v333
      %v490 = vunpack.c.l.b16 %v334
      %v491 = vunpack.c.l.b16 %v335
      %v492 = vpack.c.b16 %v445, %v444
      %v493 = vpack.c.b16 %v447, %v446
      %v494 = vpack.c.b16 %v449, %v448
      %v495 = vpack.c.b16 %v451, %v450
      %v496 = vpack.c.b16 %v453, %v452
      %v497 = vpack.c.b16 %v455, %v454
      %v498 = vpack.c.b16 %v457, %v456
      %v499 = vpack.c.b16 %v459, %v458
      %v500 = vpack.c.b16 %v461, %v460
      %v501 = vpack.c.b16 %v463, %v462
      %v502 = vpack.c.b16 %v465, %v464
      %v503 = vpack.c.b16 %v467, %v466
      %v504 = vpack.c.b16 %v469, %v468
      %v505 = vpack.c.b16 %v471, %v470
      %v506 = vpack.c.b16 %v473, %v472
      %v507 = vpack.c.b16 %v475, %v474
      %v508 = vpack.c.b16 %v477, %v476
      %v509 = vpack.c.b16 %v479, %v478
      %v510 = vpack.c.b16 %v481, %v480
      %v511 = vpack.c.b16 %v483, %v482
      %v512 = vpack.c.b16 %v485, %v484
      %v513 = vpack.c.b16 %v487, %v486
      %v514 = vpack.c.b16 %v489, %v488
      %v515 = vpack.c.b16 %v491, %v490
      %540 = vmatpush.bf16.msra.mxu0 %v499
      %541 = vmatpush.bf16.msra.mxu0 %v498
      %542 = vmatpush.bf16.msra.mxu0 %v497
      %543 = vmatpush.bf16.msra.mxu0 %v496
      %544 = vmatpush.bf16.msra.mxu0 %v495
      %545 = vmatpush.bf16.msra.mxu0 %v494
      %546 = vmatpush.bf16.msra.mxu0 %v493
      %547 = vmatpush.bf16.msra.mxu0 %v492
      %548 = vmatmul.bf16.gmra.mxu0 %v368
      %v549 = vpop.f32.mrf.mxu0
      %v550 = vadd.f32 0.0, %v549
      %v551 = vpop.f32.mrf.mxu0
      %v552 = vadd.f32 0.0, %v551
      %553 = vmatmul.bf16.gmra.mxu0 %v369
      %v554 = vpop.f32.mrf.mxu0
      %v555 = vadd.f32 0.0, %v554
      %v556 = vpop.f32.mrf.mxu0
      %v557 = vadd.f32 0.0, %v556
      %558 = vmatmul.bf16.gmra.mxu0 %v370
      %v559 = vpop.f32.mrf.mxu0
      %v560 = vadd.f32 0.0, %v559
      %v561 = vpop.f32.mrf.mxu0
      %v562 = vadd.f32 0.0, %v561
      %563 = vmatmul.bf16.gmra.mxu0 %v371
      %v564 = vpop.f32.mrf.mxu0
      %v565 = vadd.f32 0.0, %v564
      %v566 = vpop.f32.mrf.mxu0
      %v567 = vadd.f32 0.0, %v566
      %568 = vmatmul.bf16.gmra.mxu0 %v372
      %v569 = vpop.f32.mrf.mxu0
      %v570 = vadd.f32 0.0, %v569
      %v571 = vpop.f32.mrf.mxu0
      %v572 = vadd.f32 0.0, %v571
      %573 = vmatmul.bf16.gmra.mxu0 %v373
      %v574 = vpop.f32.mrf.mxu0
      %v575 = vadd.f32 0.0, %v574
      %v576 = vpop.f32.mrf.mxu0
      %v577 = vadd.f32 0.0, %v576
      %578 = vmatmul.bf16.gmra.mxu0 %v374
      %v579 = vpop.f32.mrf.mxu0
      %v580 = vadd.f32 0.0, %v579
      %v581 = vpop.f32.mrf.mxu0
      %v582 = vadd.f32 0.0, %v581
      %583 = vmatmul.bf16.gmra.mxu0 %v375
      %v584 = vpop.f32.mrf.mxu0
      %v585 = vadd.f32 0.0, %v584
      %v586 = vpop.f32.mrf.mxu0
      %v587 = vadd.f32 0.0, %v586
      %588 = vdwg.mxu0
      %589 = vmatpush.bf16.msra.mxu0 %v507
      %590 = vmatpush.bf16.msra.mxu0 %v506
      %591 = vmatpush.bf16.msra.mxu0 %v505
      %592 = vmatpush.bf16.msra.mxu0 %v504
      %593 = vmatpush.bf16.msra.mxu0 %v503
      %594 = vmatpush.bf16.msra.mxu0 %v502
      %595 = vmatpush.bf16.msra.mxu0 %v501
      %596 = vmatpush.bf16.msra.mxu0 %v500
      %597 = vmatmul.bf16.gmra.mxu0 %v369
      %v598 = vpop.f32.mrf.mxu0
      %v599 = vadd.f32 %v550, %v598
      %v600 = vpop.f32.mrf.mxu0
      %v601 = vadd.f32 %v552, %v600
      %602 = vmatmul.bf16.gmra.mxu0 %v370
      %v603 = vpop.f32.mrf.mxu0
      %v604 = vadd.f32 %v555, %v603
      %v605 = vpop.f32.mrf.mxu0
      %v606 = vadd.f32 %v557, %v605
      %607 = vmatmul.bf16.gmra.mxu0 %v371
      %v608 = vpop.f32.mrf.mxu0
      %v609 = vadd.f32 %v560, %v608
      %v610 = vpop.f32.mrf.mxu0
      %v611 = vadd.f32 %v562, %v610
      %612 = vmatmul.bf16.gmra.mxu0 %v372
      %v613 = vpop.f32.mrf.mxu0
      %v614 = vadd.f32 %v565, %v613
      %v615 = vpop.f32.mrf.mxu0
      %v616 = vadd.f32 %v567, %v615
      %617 = vmatmul.bf16.gmra.mxu0 %v373
      %v618 = vpop.f32.mrf.mxu0
      %v619 = vadd.f32 %v570, %v618
      %v620 = vpop.f32.mrf.mxu0
      %v621 = vadd.f32 %v572, %v620
      %622 = vmatmul.bf16.gmra.mxu0 %v374
      %v623 = vpop.f32.mrf.mxu0
      %v624 = vadd.f32 %v575, %v623
      %v625 = vpop.f32.mrf.mxu0
      %v626 = vadd.f32 %v577, %v625
      %627 = vmatmul.bf16.gmra.mxu0 %v375
      %v628 = vpop.f32.mrf.mxu0
      %v629 = vadd.f32 %v580, %v628
      %v630 = vpop.f32.mrf.mxu0
      %v631 = vadd.f32 %v582, %v630
      %632 = vmatmul.bf16.gmra.mxu0 %v388
      %v633 = vpop.f32.mrf.mxu0
      %v634 = vadd.f32 %v585, %v633
      %v635 = vpop.f32.mrf.mxu0
      %v636 = vadd.f32 %v587, %v635
      %637 = vdwg.mxu0
      %638 = vmatpush.bf16.msra.mxu0 %v515
      %639 = vmatpush.bf16.msra.mxu0 %v514
      %640 = vmatpush.bf16.msra.mxu0 %v513
      %641 = vmatpush.bf16.msra.mxu0 %v512
      %642 = vmatpush.bf16.msra.mxu0 %v511
      %643 = vmatpush.bf16.msra.mxu0 %v510
      %644 = vmatpush.bf16.msra.mxu0 %v509
      %645 = vmatpush.bf16.msra.mxu0 %v508
      %646 = vmatmul.bf16.gmra.mxu0 %v370
      %v647 = vpop.f32.mrf.mxu0
      %v648 = vadd.f32 %v599, %v647
      %v649 = vpop.f32.mrf.mxu0
      %v650 = vadd.f32 %v601, %v649
      %651 = vmatmul.bf16.gmra.mxu0 %v371
      %v652 = vpop.f32.mrf.mxu0
      %v653 = vadd.f32 %v604, %v652
      %v654 = vpop.f32.mrf.mxu0
      %v655 = vadd.f32 %v606, %v654
      %656 = vmatmul.bf16.gmra.mxu0 %v372
      %v657 = vpop.f32.mrf.mxu0
      %v658 = vadd.f32 %v609, %v657
      %v659 = vpop.f32.mrf.mxu0
      %v660 = vadd.f32 %v611, %v659
      %661 = vmatmul.bf16.gmra.mxu0 %v373
      %v662 = vpop.f32.mrf.mxu0
      %v663 = vadd.f32 %v614, %v662
      %v664 = vpop.f32.mrf.mxu0
      %v665 = vadd.f32 %v616, %v664
      %666 = vmatmul.bf16.gmra.mxu0 %v374
      %v667 = vpop.f32.mrf.mxu0
      %v668 = vadd.f32 %v619, %v667
      %v669 = vpop.f32.mrf.mxu0
      %v670 = vadd.f32 %v621, %v669
      %671 = vmatmul.bf16.gmra.mxu0 %v375
      %v672 = vpop.f32.mrf.mxu0
      %v673 = vadd.f32 %v624, %v672
      %v674 = vpop.f32.mrf.mxu0
      %v675 = vadd.f32 %v626, %v674
      %676 = vmatmul.bf16.gmra.mxu0 %v388
      %v677 = vpop.f32.mrf.mxu0
      %v678 = vadd.f32 %v629, %v677
      %v679 = vpop.f32.mrf.mxu0
      %v680 = vadd.f32 %v631, %v679
      %681 = vmatmul.bf16.gmra.mxu0 %v394
      %v682 = vpop.f32.mrf.mxu0
      %v683 = vadd.f32 %v634, %v682
      %v684 = vpop.f32.mrf.mxu0
      %v685 = vadd.f32 %v636, %v684
      %686 = vdwg.mxu0
      %v687 = vld [vmem:[%s2] sm:$0x1]
      %v689 = vperm.slane %v687, 0
      %v691 = vmul.f32 %v648, %v689
      %v692 = vmul.f32 %v650, %v689
      %v693 = vmul.f32 %v653, %v689
      %v694 = vmul.f32 %v655, %v689
      %v695 = vmul.f32 %v658, %v689
      %v696 = vmul.f32 %v660, %v689
      %v697 = vmul.f32 %v663, %v689
      %v698 = vmul.f32 %v665, %v689
      %v699 = vmul.f32 %v668, %v689
      %v700 = vmul.f32 %v670, %v689
      %v701 = vmul.f32 %v673, %v689
      %v702 = vmul.f32 %v675, %v689
      %v703 = vmul.f32 %v678, %v689
      %v704 = vmul.f32 %v680, %v689
      %v705 = vmul.f32 %v683, %v689
      %v706 = vmul.f32 %v685, %v689
      %s707 = scalar_lea.vmem %s2, 1
      %v708 = vld [vmem:[%s707] sm:$0x1]
      %v710 = vperm.slane %v708, 0
      %v712 = vadd.f32 %v691, %v710
      %v713 = vadd.f32 %v692, %v710
      %v714 = vadd.f32 %v693, %v710
      %v715 = vadd.f32 %v694, %v710
      %v716 = vadd.f32 %v695, %v710
      %v717 = vadd.f32 %v696, %v710
      %v718 = vadd.f32 %v697, %v710
      %v719 = vadd.f32 %v698, %v710
      %v720 = vadd.f32 %v699, %v710
      %v721 = vadd.f32 %v700, %v710
      %v722 = vadd.f32 %v701, %v710
      %v723 = vadd.f32 %v702, %v710
      %v724 = vadd.f32 %v703, %v710
      %v725 = vadd.f32 %v704, %v710
      %v726 = vadd.f32 %v705, %v710
      %v727 = vadd.f32 %v706, %v710
      %v728 = vmax.f32 %v712, 0.0
      %v729 = vmax.f32 %v713, 0.0
      %v730 = vmax.f32 %v714, 0.0
      %v731 = vmax.f32 %v715, 0.0
      %v732 = vmax.f32 %v716, 0.0
      %v733 = vmax.f32 %v717, 0.0
      %v734 = vmax.f32 %v718, 0.0
      %v735 = vmax.f32 %v719, 0.0
      %v736 = vmax.f32 %v720, 0.0
      %v737 = vmax.f32 %v721, 0.0
      %v738 = vmax.f32 %v722, 0.0
      %v739 = vmax.f32 %v723, 0.0
      %v740 = vmax.f32 %v724, 0.0
      %v741 = vmax.f32 %v725, 0.0
      %v742 = vmax.f32 %v726, 0.0
      %v743 = vmax.f32 %v727, 0.0
      %v744 = vpack.c.bf16 %v728, %v728
      %v745 = vpack.c.bf16 %v729, %v729
      %v746 = vpack.c.bf16 %v730, %v730
      %v747 = vpack.c.bf16 %v731, %v731
      %v748 = vpack.c.bf16 %v732, %v732
      %v749 = vpack.c.bf16 %v733, %v733
      %v750 = vpack.c.bf16 %v734, %v734
      %v751 = vpack.c.bf16 %v735, %v735
      %v752 = vpack.c.bf16 %v736, %v736
      %v753 = vpack.c.bf16 %v737, %v737
      %v754 = vpack.c.bf16 %v738, %v738
      %v755 = vpack.c.bf16 %v739, %v739
      %v756 = vpack.c.bf16 %v740, %v740
      %v757 = vpack.c.bf16 %v741, %v741
      %v758 = vpack.c.bf16 %v742, %v742
      %v759 = vpack.c.bf16 %v743, %v743
      %s760 = scalar_lea.vmem %s1, 192
      %v761 = vld [vmem:[%s760] sm:$0xf]
      %v762 = vld [vmem:[%s760 + $0x4] sm:$0xf]
      %v763 = vld [vmem:[%s760 + $0x8] sm:$0xf]
      %v764 = vld [vmem:[%s760 + $0xc] sm:$0xf]
      %v765 = vld [vmem:[%s760 + $0x10] sm:$0xf]
      %v766 = vld [vmem:[%s760 + $0x14] sm:$0xf]
      %v767 = vld [vmem:[%s760 + $0x18] sm:$0xf]
      %v768 = vld [vmem:[%s760 + $0x1c] sm:$0xf]
      %v769 = vld [vmem:[%s760 + $0x20] sm:$0xf]
      %v770 = vld [vmem:[%s760 + $0x24] sm:$0xf]
      %v771 = vld [vmem:[%s760 + $0x28] sm:$0xf]
      %v772 = vld [vmem:[%s760 + $0x2c] sm:$0xf]
      %v773 = vld [vmem:[%s760 + $0x30] sm:$0xf]
      %v774 = vld [vmem:[%s760 + $0x34] sm:$0xf]
      %v775 = vld [vmem:[%s760 + $0x38] sm:$0xf]
      %v776 = vld [vmem:[%s760 + $0x3c] sm:$0xf]
      %v777 = vld [vmem:[%s760 + $0x40] sm:$0xf]
      %v778 = vld [vmem:[%s760 + $0x44] sm:$0xf]
      %v779 = vld [vmem:[%s760 + $0x48] sm:$0xf]
      %v780 = vld [vmem:[%s760 + $0x4c] sm:$0xf]
      %v781 = vld [vmem:[%s760 + $0x50] sm:$0xf]
      %v782 = vld [vmem:[%s760 + $0x54] sm:$0xf]
      %v783 = vld [vmem:[%s760 + $0x58] sm:$0xf]
      %v784 = vld [vmem:[%s760 + $0x5c] sm:$0xf]
      %v785 = vld [vmem:[%s760 + $0x60] sm:$0xf]
      %v786 = vld [vmem:[%s760 + $0x64] sm:$0xf]
      %v787 = vld [vmem:[%s760 + $0x68] sm:$0xf]
      %v788 = vld [vmem:[%s760 + $0x6c] sm:$0xf]
      %v789 = vld [vmem:[%s760 + $0x70] sm:$0xf]
      %v790 = vld [vmem:[%s760 + $0x74] sm:$0xf]
      %v791 = vld [vmem:[%s760 + $0x78] sm:$0xf]
      %v792 = vld [vmem:[%s760 + $0x7c] sm:$0xf]
      %v793 = vld [vmem:[%s760 + $0x80] sm:$0xf]
      %v794 = vld [vmem:[%s760 + $0x84] sm:$0xf]
      %v795 = vld [vmem:[%s760 + $0x88] sm:$0xf]
      %v796 = vld [vmem:[%s760 + $0x8c] sm:$0xf]
      %v797 = vld [vmem:[%s760 + $0x90] sm:$0xf]
      %v798 = vld [vmem:[%s760 + $0x94] sm:$0xf]
      %v799 = vld [vmem:[%s760 + $0x98] sm:$0xf]
      %v800 = vld [vmem:[%s760 + $0x9c] sm:$0xf]
      %v801 = vld [vmem:[%s760 + $0xa0] sm:$0xf]
      %v802 = vld [vmem:[%s760 + $0xa4] sm:$0xf]
      %v803 = vld [vmem:[%s760 + $0xa8] sm:$0xf]
      %v804 = vld [vmem:[%s760 + $0xac] sm:$0xf]
      %v805 = vld [vmem:[%s760 + $0xb0] sm:$0xf]
      %v806 = vld [vmem:[%s760 + $0xb4] sm:$0xf]
      %v807 = vld [vmem:[%s760 + $0xb8] sm:$0xf]
      %v808 = vld [vmem:[%s760 + $0xbc] sm:$0xf]
      %v825 = vunpack.c.l.b16 %v744
      %v826 = vunpack.c.l.b16 %v745
      %v827 = vunpack.c.l.b16 %v746
      %v828 = vunpack.c.l.b16 %v747
      %v829 = vunpack.c.l.b16 %v748
      %v830 = vunpack.c.l.b16 %v749
      %v831 = vunpack.c.l.b16 %v750
      %v832 = vunpack.c.l.b16 %v751
      %v833 = vunpack.c.l.b16 %v752
      %v834 = vunpack.c.l.b16 %v753
      %v835 = vunpack.c.l.b16 %v754
      %v836 = vunpack.c.l.b16 %v755
      %v837 = vunpack.c.l.b16 %v756
      %v838 = vunpack.c.l.b16 %v757
      %v839 = vunpack.c.l.b16 %v758
      %v840 = vunpack.c.l.b16 %v759
      %v841 = vpack.c.b16 %v826, %v825
      %v842 = vpack.c.b16 %v828, %v827
      %v843 = vpack.c.b16 %v830, %v829
      %v844 = vpack.c.b16 %v832, %v831
      %v845 = vpack.c.b16 %v834, %v833
      %v846 = vpack.c.b16 %v836, %v835
      %v847 = vpack.c.b16 %v838, %v837
      %v848 = vpack.c.b16 %v840, %v839
      %v850 = vshrl.u32 %v841, 16
      %v852 = vrot.slane %v850, 7
      %v853 = vshll.u32 %v841, 16
      %v855 = vor.u32 %v852, %v853
      %v857 = vshrl.u32 %v842, 16
      %v859 = vrot.slane %v857, 7
      %v860 = vshll.u32 %v842, 16
      %v862 = vor.u32 %v859, %v860
      %v864 = vshrl.u32 %v843, 16
      %v866 = vrot.slane %v864, 7
      %v867 = vshll.u32 %v843, 16
      %v869 = vor.u32 %v866, %v867
      %v871 = vshrl.u32 %v844, 16
      %v873 = vrot.slane %v871, 7
      %v874 = vshll.u32 %v844, 16
      %v876 = vor.u32 %v873, %v874
      %v878 = vshrl.u32 %v845, 16
      %v880 = vrot.slane %v878, 7
      %v881 = vshll.u32 %v845, 16
      %v883 = vor.u32 %v880, %v881
      %v885 = vshrl.u32 %v846, 16
      %v887 = vrot.slane %v885, 7
      %v888 = vshll.u32 %v846, 16
      %v890 = vor.u32 %v887, %v888
      %v892 = vshrl.u32 %v847, 16
      %v894 = vrot.slane %v892, 7
      %v895 = vshll.u32 %v847, 16
      %v897 = vor.u32 %v894, %v895
      %v899 = vshrl.u32 %v848, 16
      %v901 = vrot.slane %v899, 7
      %v902 = vshll.u32 %v848, 16
      %v904 = vor.u32 %v901, %v902
      %vm913 = vcmask 1040384
      %vm914 = vsmask.f32 256
      %vm915 = vmand %vm913, %vm914
      %v916 = vsel %vm915, 0, %v855
      %v917 = vsel %vm915, 0, %v862
      %v918 = vsel %vm915, 0, %v869
      %v919 = vsel %vm915, 0, %v876
      %v920 = vsel %vm915, 0, %v883
      %v921 = vsel %vm915, 0, %v890
      %v922 = vsel %vm915, 0, %v897
      %v923 = vsel %vm915, 0, %v904
      %v924 = vrot.slane %v853, 1
      %v925 = vor.u32 %v850, %v924
      %v926 = vrot.slane %v860, 1
      %v927 = vor.u32 %v857, %v926
      %v928 = vrot.slane %v867, 1
      %v929 = vor.u32 %v864, %v928
      %v930 = vrot.slane %v874, 1
      %v931 = vor.u32 %v871, %v930
      %v932 = vrot.slane %v881, 1
      %v933 = vor.u32 %v878, %v932
      %v934 = vrot.slane %v888, 1
      %v935 = vor.u32 %v885, %v934
      %v936 = vrot.slane %v895, 1
      %v937 = vor.u32 %v892, %v936
      %v938 = vrot.slane %v902, 1
      %v939 = vor.u32 %v899, %v938
      %vm948 = vcmask 1047552
      %vm949 = vsmask.f32 7424
      %vm950 = vmand %vm948, %vm949
      %v951 = vsel %vm950, %v925, 0
      %v952 = vsel %vm950, %v927, 0
      %v953 = vsel %vm950, %v929, 0
      %v954 = vsel %vm950, %v931, 0
      %v955 = vsel %vm950, %v933, 0
      %v956 = vsel %vm950, %v935, 0
      %v957 = vsel %vm950, %v937, 0
      %v958 = vsel %vm950, %v939, 0
      %v1015 = vunpack.c.l.b16 %v761
      %v1016 = vunpack.c.l.b16 %v762
      %v1017 = vunpack.c.l.b16 %v763
      %v1018 = vunpack.c.l.b16 %v764
      %v1019 = vunpack.c.l.b16 %v765
      %v1020 = vunpack.c.l.b16 %v766
      %v1021 = vunpack.c.l.b16 %v767
      %v1022 = vunpack.c.l.b16 %v768
      %v1023 = vunpack.c.l.b16 %v769
      %v1024 = vunpack.c.l.b16 %v770
      %v1025 = vunpack.c.l.b16 %v771
      %v1026 = vunpack.c.l.b16 %v772
      %v1027 = vunpack.c.l.b16 %v773
      %v1028 = vunpack.c.l.b16 %v774
      %v1029 = vunpack.c.l.b16 %v775
      %v1030 = vunpack.c.l.b16 %v776
      %v1031 = vunpack.c.l.b16 %v777
      %v1032 = vunpack.c.l.b16 %v778
      %v1033 = vunpack.c.l.b16 %v779
      %v1034 = vunpack.c.l.b16 %v780
      %v1035 = vunpack.c.l.b16 %v781
      %v1036 = vunpack.c.l.b16 %v782
      %v1037 = vunpack.c.l.b16 %v783
      %v1038 = vunpack.c.l.b16 %v784
      %v1039 = vunpack.c.l.b16 %v785
      %v1040 = vunpack.c.l.b16 %v786
      %v1041 = vunpack.c.l.b16 %v787
      %v1042 = vunpack.c.l.b16 %v788
      %v1043 = vunpack.c.l.b16 %v789
      %v1044 = vunpack.c.l.b16 %v790
      %v1045 = vunpack.c.l.b16 %v791
      %v1046 = vunpack.c.l.b16 %v792
      %v1047 = vunpack.c.l.b16 %v793
      %v1048 = vunpack.c.l.b16 %v794
      %v1049 = vunpack.c.l.b16 %v795
      %v1050 = vunpack.c.l.b16 %v796
      %v1051 = vunpack.c.l.b16 %v797
      %v1052 = vunpack.c.l.b16 %v798
      %v1053 = vunpack.c.l.b16 %v799
      %v1054 = vunpack.c.l.b16 %v800
      %v1055 = vunpack.c.l.b16 %v801
      %v1056 = vunpack.c.l.b16 %v802
      %v1057 = vunpack.c.l.b16 %v803
      %v1058 = vunpack.c.l.b16 %v804
      %v1059 = vunpack.c.l.b16 %v805
      %v1060 = vunpack.c.l.b16 %v806
      %v1061 = vunpack.c.l.b16 %v807
      %v1062 = vunpack.c.l.b16 %v808
      %v1063 = vpack.c.b16 %v1016, %v1015
      %v1064 = vpack.c.b16 %v1018, %v1017
      %v1065 = vpack.c.b16 %v1020, %v1019
      %v1066 = vpack.c.b16 %v1022, %v1021
      %v1067 = vpack.c.b16 %v1024, %v1023
      %v1068 = vpack.c.b16 %v1026, %v1025
      %v1069 = vpack.c.b16 %v1028, %v1027
      %v1070 = vpack.c.b16 %v1030, %v1029
      %v1071 = vpack.c.b16 %v1032, %v1031
      %v1072 = vpack.c.b16 %v1034, %v1033
      %v1073 = vpack.c.b16 %v1036, %v1035
      %v1074 = vpack.c.b16 %v1038, %v1037
      %v1075 = vpack.c.b16 %v1040, %v1039
      %v1076 = vpack.c.b16 %v1042, %v1041
      %v1077 = vpack.c.b16 %v1044, %v1043
      %v1078 = vpack.c.b16 %v1046, %v1045
      %v1079 = vpack.c.b16 %v1048, %v1047
      %v1080 = vpack.c.b16 %v1050, %v1049
      %v1081 = vpack.c.b16 %v1052, %v1051
      %v1082 = vpack.c.b16 %v1054, %v1053
      %v1083 = vpack.c.b16 %v1056, %v1055
      %v1084 = vpack.c.b16 %v1058, %v1057
      %v1085 = vpack.c.b16 %v1060, %v1059
      %v1086 = vpack.c.b16 %v1062, %v1061
      %1111 = vmatpush.bf16.msra.mxu0 %v1070
      %1112 = vmatpush.bf16.msra.mxu0 %v1069
      %1113 = vmatpush.bf16.msra.mxu0 %v1068
      %1114 = vmatpush.bf16.msra.mxu0 %v1067
      %1115 = vmatpush.bf16.msra.mxu0 %v1066
      %1116 = vmatpush.bf16.msra.mxu0 %v1065
      %1117 = vmatpush.bf16.msra.mxu0 %v1064
      %1118 = vmatpush.bf16.msra.mxu0 %v1063
      %1119 = vmatmul.bf16.gmra.mxu0 %v916
      %v1120 = vpop.f32.mrf.mxu0
      %v1121 = vadd.f32 0.0, %v1120
      %v1122 = vpop.f32.mrf.mxu0
      %v1123 = vadd.f32 0.0, %v1122
      %1124 = vmatmul.bf16.gmra.mxu0 %v917
      %v1125 = vpop.f32.mrf.mxu0
      %v1126 = vadd.f32 0.0, %v1125
      %v1127 = vpop.f32.mrf.mxu0
      %v1128 = vadd.f32 0.0, %v1127
      %1129 = vmatmul.bf16.gmra.mxu0 %v918
      %v1130 = vpop.f32.mrf.mxu0
      %v1131 = vadd.f32 0.0, %v1130
      %v1132 = vpop.f32.mrf.mxu0
      %v1133 = vadd.f32 0.0, %v1132
      %1134 = vmatmul.bf16.gmra.mxu0 %v919
      %v1135 = vpop.f32.mrf.mxu0
      %v1136 = vadd.f32 0.0, %v1135
      %v1137 = vpop.f32.mrf.mxu0
      %v1138 = vadd.f32 0.0, %v1137
      %1139 = vmatmul.bf16.gmra.mxu0 %v920
      %v1140 = vpop.f32.mrf.mxu0
      %v1141 = vadd.f32 0.0, %v1140
      %v1142 = vpop.f32.mrf.mxu0
      %v1143 = vadd.f32 0.0, %v1142
      %1144 = vmatmul.bf16.gmra.mxu0 %v921
      %v1145 = vpop.f32.mrf.mxu0
      %v1146 = vadd.f32 0.0, %v1145
      %v1147 = vpop.f32.mrf.mxu0
      %v1148 = vadd.f32 0.0, %v1147
      %1149 = vmatmul.bf16.gmra.mxu0 %v922
      %v1150 = vpop.f32.mrf.mxu0
      %v1151 = vadd.f32 0.0, %v1150
      %v1152 = vpop.f32.mrf.mxu0
      %v1153 = vadd.f32 0.0, %v1152
      %1154 = vmatmul.bf16.gmra.mxu0 %v923
      %v1155 = vpop.f32.mrf.mxu0
      %v1156 = vadd.f32 0.0, %v1155
      %v1157 = vpop.f32.mrf.mxu0
      %v1158 = vadd.f32 0.0, %v1157
      %1159 = vdwg.mxu0
      %1160 = vmatpush.bf16.msra.mxu0 %v1078
      %1161 = vmatpush.bf16.msra.mxu0 %v1077
      %1162 = vmatpush.bf16.msra.mxu0 %v1076
      %1163 = vmatpush.bf16.msra.mxu0 %v1075
      %1164 = vmatpush.bf16.msra.mxu0 %v1074
      %1165 = vmatpush.bf16.msra.mxu0 %v1073
      %1166 = vmatpush.bf16.msra.mxu0 %v1072
      %1167 = vmatpush.bf16.msra.mxu0 %v1071
      %1168 = vmatmul.bf16.gmra.mxu0 %v841
      %v1169 = vpop.f32.mrf.mxu0
      %v1170 = vadd.f32 %v1121, %v1169
      %v1171 = vpop.f32.mrf.mxu0
      %v1172 = vadd.f32 %v1123, %v1171
      %1173 = vmatmul.bf16.gmra.mxu0 %v842
      %v1174 = vpop.f32.mrf.mxu0
      %v1175 = vadd.f32 %v1126, %v1174
      %v1176 = vpop.f32.mrf.mxu0
      %v1177 = vadd.f32 %v1128, %v1176
      %1178 = vmatmul.bf16.gmra.mxu0 %v843
      %v1179 = vpop.f32.mrf.mxu0
      %v1180 = vadd.f32 %v1131, %v1179
      %v1181 = vpop.f32.mrf.mxu0
      %v1182 = vadd.f32 %v1133, %v1181
      %1183 = vmatmul.bf16.gmra.mxu0 %v844
      %v1184 = vpop.f32.mrf.mxu0
      %v1185 = vadd.f32 %v1136, %v1184
      %v1186 = vpop.f32.mrf.mxu0
      %v1187 = vadd.f32 %v1138, %v1186
      %1188 = vmatmul.bf16.gmra.mxu0 %v845
      %v1189 = vpop.f32.mrf.mxu0
      %v1190 = vadd.f32 %v1141, %v1189
      %v1191 = vpop.f32.mrf.mxu0
      %v1192 = vadd.f32 %v1143, %v1191
      %1193 = vmatmul.bf16.gmra.mxu0 %v846
      %v1194 = vpop.f32.mrf.mxu0
      %v1195 = vadd.f32 %v1146, %v1194
      %v1196 = vpop.f32.mrf.mxu0
      %v1197 = vadd.f32 %v1148, %v1196
      %1198 = vmatmul.bf16.gmra.mxu0 %v847
      %v1199 = vpop.f32.mrf.mxu0
      %v1200 = vadd.f32 %v1151, %v1199
      %v1201 = vpop.f32.mrf.mxu0
      %v1202 = vadd.f32 %v1153, %v1201
      %1203 = vmatmul.bf16.gmra.mxu0 %v848
      %v1204 = vpop.f32.mrf.mxu0
      %v1205 = vadd.f32 %v1156, %v1204
      %v1206 = vpop.f32.mrf.mxu0
      %v1207 = vadd.f32 %v1158, %v1206
      %1208 = vdwg.mxu0
      %1209 = vmatpush.bf16.msra.mxu0 %v1086
      %1210 = vmatpush.bf16.msra.mxu0 %v1085
      %1211 = vmatpush.bf16.msra.mxu0 %v1084
      %1212 = vmatpush.bf16.msra.mxu0 %v1083
      %1213 = vmatpush.bf16.msra.mxu0 %v1082
      %1214 = vmatpush.bf16.msra.mxu0 %v1081
      %1215 = vmatpush.bf16.msra.mxu0 %v1080
      %1216 = vmatpush.bf16.msra.mxu0 %v1079
      %1217 = vmatmul.bf16.gmra.mxu0 %v951
      %v1218 = vpop.f32.mrf.mxu0
      %v1219 = vadd.f32 %v1170, %v1218
      %v1220 = vpop.f32.mrf.mxu0
      %v1221 = vadd.f32 %v1172, %v1220
      %1222 = vmatmul.bf16.gmra.mxu0 %v952
      %v1223 = vpop.f32.mrf.mxu0
      %v1224 = vadd.f32 %v1175, %v1223
      %v1225 = vpop.f32.mrf.mxu0
      %v1226 = vadd.f32 %v1177, %v1225
      %1227 = vmatmul.bf16.gmra.mxu0 %v953
      %v1228 = vpop.f32.mrf.mxu0
      %v1229 = vadd.f32 %v1180, %v1228
      %v1230 = vpop.f32.mrf.mxu0
      %v1231 = vadd.f32 %v1182, %v1230
      %1232 = vmatmul.bf16.gmra.mxu0 %v954
      %v1233 = vpop.f32.mrf.mxu0
      %v1234 = vadd.f32 %v1185, %v1233
      %v1235 = vpop.f32.mrf.mxu0
      %v1236 = vadd.f32 %v1187, %v1235
      %1237 = vmatmul.bf16.gmra.mxu0 %v955
      %v1238 = vpop.f32.mrf.mxu0
      %v1239 = vadd.f32 %v1190, %v1238
      %v1240 = vpop.f32.mrf.mxu0
      %v1241 = vadd.f32 %v1192, %v1240
      %1242 = vmatmul.bf16.gmra.mxu0 %v956
      %v1243 = vpop.f32.mrf.mxu0
      %v1244 = vadd.f32 %v1195, %v1243
      %v1245 = vpop.f32.mrf.mxu0
      %v1246 = vadd.f32 %v1197, %v1245
      %1247 = vmatmul.bf16.gmra.mxu0 %v957
      %v1248 = vpop.f32.mrf.mxu0
      %v1249 = vadd.f32 %v1200, %v1248
      %v1250 = vpop.f32.mrf.mxu0
      %v1251 = vadd.f32 %v1202, %v1250
      %1252 = vmatmul.bf16.gmra.mxu0 %v958
      %v1253 = vpop.f32.mrf.mxu0
      %v1254 = vadd.f32 %v1205, %v1253
      %v1255 = vpop.f32.mrf.mxu0
      %v1256 = vadd.f32 %v1207, %v1255
      %1257 = vdwg.mxu0
      %s1258 = scalar_lea.vmem %s2, 2
      %v1259 = vld [vmem:[%s1258] sm:$0x1]
      %v1261 = vperm.slane %v1259, 0
      %v1263 = vmul.f32 %v1219, %v1261
      %v1264 = vmul.f32 %v1221, %v1261
      %v1265 = vmul.f32 %v1224, %v1261
      %v1266 = vmul.f32 %v1226, %v1261
      %v1267 = vmul.f32 %v1229, %v1261
      %v1268 = vmul.f32 %v1231, %v1261
      %v1269 = vmul.f32 %v1234, %v1261
      %v1270 = vmul.f32 %v1236, %v1261
      %v1271 = vmul.f32 %v1239, %v1261
      %v1272 = vmul.f32 %v1241, %v1261
      %v1273 = vmul.f32 %v1244, %v1261
      %v1274 = vmul.f32 %v1246, %v1261
      %v1275 = vmul.f32 %v1249, %v1261
      %v1276 = vmul.f32 %v1251, %v1261
      %v1277 = vmul.f32 %v1254, %v1261
      %v1278 = vmul.f32 %v1256, %v1261
      %s1279 = scalar_lea.vmem %s2, 3
      %v1280 = vld [vmem:[%s1279] sm:$0x1]
      %v1282 = vperm.slane %v1280, 0
      %v1284 = vadd.f32 %v1263, %v1282
      %v1285 = vadd.f32 %v1264, %v1282
      %v1286 = vadd.f32 %v1265, %v1282
      %v1287 = vadd.f32 %v1266, %v1282
      %v1288 = vadd.f32 %v1267, %v1282
      %v1289 = vadd.f32 %v1268, %v1282
      %v1290 = vadd.f32 %v1269, %v1282
      %v1291 = vadd.f32 %v1270, %v1282
      %v1292 = vadd.f32 %v1271, %v1282
      %v1293 = vadd.f32 %v1272, %v1282
      %v1294 = vadd.f32 %v1273, %v1282
      %v1295 = vadd.f32 %v1274, %v1282
      %v1296 = vadd.f32 %v1275, %v1282
      %v1297 = vadd.f32 %v1276, %v1282
      %v1298 = vadd.f32 %v1277, %v1282
      %v1299 = vadd.f32 %v1278, %v1282
      %v1300 = vmax.f32 %v1284, 0.0
      %v1301 = vmax.f32 %v1285, 0.0
      %v1302 = vmax.f32 %v1286, 0.0
      %v1303 = vmax.f32 %v1287, 0.0
      %v1304 = vmax.f32 %v1288, 0.0
      %v1305 = vmax.f32 %v1289, 0.0
      %v1306 = vmax.f32 %v1290, 0.0
      %v1307 = vmax.f32 %v1291, 0.0
      %v1308 = vmax.f32 %v1292, 0.0
      %v1309 = vmax.f32 %v1293, 0.0
      %v1310 = vmax.f32 %v1294, 0.0
      %v1311 = vmax.f32 %v1295, 0.0
      %v1312 = vmax.f32 %v1296, 0.0
      %v1313 = vmax.f32 %v1297, 0.0
      %v1314 = vmax.f32 %v1298, 0.0
      %v1315 = vmax.f32 %v1299, 0.0
      %v1316 = vpack.c.bf16 %v1300, %v1300
      %v1317 = vpack.c.bf16 %v1301, %v1301
      %v1318 = vpack.c.bf16 %v1302, %v1302
      %v1319 = vpack.c.bf16 %v1303, %v1303
      %v1320 = vpack.c.bf16 %v1304, %v1304
      %v1321 = vpack.c.bf16 %v1305, %v1305
      %v1322 = vpack.c.bf16 %v1306, %v1306
      %v1323 = vpack.c.bf16 %v1307, %v1307
      %v1324 = vpack.c.bf16 %v1308, %v1308
      %v1325 = vpack.c.bf16 %v1309, %v1309
      %v1326 = vpack.c.bf16 %v1310, %v1310
      %v1327 = vpack.c.bf16 %v1311, %v1311
      %v1328 = vpack.c.bf16 %v1312, %v1312
      %v1329 = vpack.c.bf16 %v1313, %v1313
      %v1330 = vpack.c.bf16 %v1314, %v1314
      %v1331 = vpack.c.bf16 %v1315, %v1315
      %v1332 = vstv %s258
      %v1333 = vadd.s32 %v1332, 1
      %v1334 = vadd.s32 %v1332, 2
      %v1335 = vadd.s32 %v1332, 3
      %vm1336 = vcmp.ge.s32.totalorder %v1332, 2
      %vm1337 = vcmp.ge.s32.totalorder %v1333, 2
      %vm1338 = vcmp.ge.s32.totalorder %v1334, 2
      %vm1339 = vcmp.ge.s32.totalorder %v1335, 2
      %v1340 = vsel %vm1336, 1, 0
      %v1341 = vsel %vm1337, 1, 0
      %v1342 = vsel %vm1338, 1, 0
      %v1343 = vsel %vm1339, 1, 0
      %vm1344 = vcmp.eq.s32.totalorder %v1340, 1
      %vm1345 = vcmp.eq.s32.totalorder %v1341, 1
      %vm1346 = vcmp.eq.s32.totalorder %v1342, 1
      %vm1347 = vcmp.eq.s32.totalorder %v1343, 1
      %v1348 = vsel %vm1344, %v1316, 0
      %v1349 = vsel %vm1344, %v1317, 0
      %v1350 = vsel %vm1345, %v1318, 0
      %v1351 = vsel %vm1345, %v1319, 0
      %v1352 = vsel %vm1346, %v1320, 0
      %v1353 = vsel %vm1346, %v1321, 0
      %v1354 = vsel %vm1347, %v1322, 0
      %v1355 = vsel %vm1347, %v1323, 0
      %s1356 = sadd.s32 %s258, 2
      %v1357 = vstv %s1356
      %v1358 = vadd.s32 %v1357, 1
      %v1359 = vadd.s32 %v1357, 2
      %v1360 = vadd.s32 %v1357, 3
      %vm1361 = vcmp.lt.s32.totalorder %v1357, 16
      %vm1362 = vcmp.lt.s32.totalorder %v1358, 16
      %vm1363 = vcmp.lt.s32.totalorder %v1359, 16
      %vm1364 = vcmp.lt.s32.totalorder %v1360, 16
      %v1365 = vsel %vm1361, 1, 0
      %v1366 = vsel %vm1362, 1, 0
      %v1367 = vsel %vm1363, 1, 0
      %v1368 = vsel %vm1364, 1, 0
      %vm1369 = vcmp.eq.s32.totalorder %v1365, 1
      %vm1370 = vcmp.eq.s32.totalorder %v1366, 1
      %vm1371 = vcmp.eq.s32.totalorder %v1367, 1
      %vm1372 = vcmp.eq.s32.totalorder %v1368, 1
      %v1373 = vsel %vm1369, %v1324, 0
      %v1374 = vsel %vm1369, %v1325, 0
      %v1375 = vsel %vm1370, %v1326, 0
      %v1376 = vsel %vm1370, %v1327, 0
      %v1377 = vsel %vm1371, %v1328, 0
      %v1378 = vsel %vm1371, %v1329, 0
      %v1379 = vsel %vm1372, %v1330, 0
      %v1380 = vsel %vm1372, %v1331, 0
      %s1381 = scalar_lea.vmem %s1, 384
      %v1382 = vld [vmem:[%s1381] sm:$0xf]
      %v1383 = vld [vmem:[%s1381 + $0x4] sm:$0xf]
      %v1384 = vld [vmem:[%s1381 + $0x8] sm:$0xf]
      %v1385 = vld [vmem:[%s1381 + $0xc] sm:$0xf]
      %v1386 = vld [vmem:[%s1381 + $0x10] sm:$0xf]
      %v1387 = vld [vmem:[%s1381 + $0x14] sm:$0xf]
      %v1388 = vld [vmem:[%s1381 + $0x18] sm:$0xf]
      %v1389 = vld [vmem:[%s1381 + $0x1c] sm:$0xf]
      %v1390 = vld [vmem:[%s1381 + $0x20] sm:$0xf]
      %v1391 = vld [vmem:[%s1381 + $0x24] sm:$0xf]
      %v1392 = vld [vmem:[%s1381 + $0x28] sm:$0xf]
      %v1393 = vld [vmem:[%s1381 + $0x2c] sm:$0xf]
      %v1394 = vld [vmem:[%s1381 + $0x30] sm:$0xf]
      %v1395 = vld [vmem:[%s1381 + $0x34] sm:$0xf]
      %v1396 = vld [vmem:[%s1381 + $0x38] sm:$0xf]
      %v1397 = vld [vmem:[%s1381 + $0x3c] sm:$0xf]
      %v1398 = vld [vmem:[%s1381 + $0x40] sm:$0xf]
      %v1399 = vld [vmem:[%s1381 + $0x44] sm:$0xf]
      %v1400 = vld [vmem:[%s1381 + $0x48] sm:$0xf]
      %v1401 = vld [vmem:[%s1381 + $0x4c] sm:$0xf]
      %v1402 = vld [vmem:[%s1381 + $0x50] sm:$0xf]
      %v1403 = vld [vmem:[%s1381 + $0x54] sm:$0xf]
      %v1404 = vld [vmem:[%s1381 + $0x58] sm:$0xf]
      %v1405 = vld [vmem:[%s1381 + $0x5c] sm:$0xf]
      %v1406 = vld [vmem:[%s1381 + $0x60] sm:$0xf]
      %v1407 = vld [vmem:[%s1381 + $0x64] sm:$0xf]
      %v1408 = vld [vmem:[%s1381 + $0x68] sm:$0xf]
      %v1409 = vld [vmem:[%s1381 + $0x6c] sm:$0xf]
      %v1410 = vld [vmem:[%s1381 + $0x70] sm:$0xf]
      %v1411 = vld [vmem:[%s1381 + $0x74] sm:$0xf]
      %v1412 = vld [vmem:[%s1381 + $0x78] sm:$0xf]
      %v1413 = vld [vmem:[%s1381 + $0x7c] sm:$0xf]
      %v1414 = vld [vmem:[%s1381 + $0x80] sm:$0xf]
      %v1415 = vld [vmem:[%s1381 + $0x84] sm:$0xf]
      %v1416 = vld [vmem:[%s1381 + $0x88] sm:$0xf]
      %v1417 = vld [vmem:[%s1381 + $0x8c] sm:$0xf]
      %v1418 = vld [vmem:[%s1381 + $0x90] sm:$0xf]
      %v1419 = vld [vmem:[%s1381 + $0x94] sm:$0xf]
      %v1420 = vld [vmem:[%s1381 + $0x98] sm:$0xf]
      %v1421 = vld [vmem:[%s1381 + $0x9c] sm:$0xf]
      %v1422 = vld [vmem:[%s1381 + $0xa0] sm:$0xf]
      %v1423 = vld [vmem:[%s1381 + $0xa4] sm:$0xf]
      %v1424 = vld [vmem:[%s1381 + $0xa8] sm:$0xf]
      %v1425 = vld [vmem:[%s1381 + $0xac] sm:$0xf]
      %v1426 = vld [vmem:[%s1381 + $0xb0] sm:$0xf]
      %v1427 = vld [vmem:[%s1381 + $0xb4] sm:$0xf]
      %v1428 = vld [vmem:[%s1381 + $0xb8] sm:$0xf]
      %v1429 = vld [vmem:[%s1381 + $0xbc] sm:$0xf]
      %v1438 = vunpack.c.l.b16 %v1348
      %v1439 = vunpack.c.l.b16 %v1349
      %v1440 = vunpack.c.l.b16 %v1350
      %v1441 = vunpack.c.l.b16 %v1351
      %v1442 = vunpack.c.l.b16 %v1352
      %v1443 = vunpack.c.l.b16 %v1353
      %v1444 = vunpack.c.l.b16 %v1354
      %v1445 = vunpack.c.l.b16 %v1355
      %v1446 = vpack.c.b16 %v1439, %v1438
      %v1447 = vpack.c.b16 %v1441, %v1440
      %v1448 = vpack.c.b16 %v1443, %v1442
      %v1449 = vpack.c.b16 %v1445, %v1444
      %v1462 = vunpack.c.l.b16 %v1320
      %v1463 = vunpack.c.l.b16 %v1321
      %v1464 = vunpack.c.l.b16 %v1322
      %v1465 = vunpack.c.l.b16 %v1323
      %v1466 = vunpack.c.l.b16 %v1324
      %v1467 = vunpack.c.l.b16 %v1325
      %v1468 = vunpack.c.l.b16 %v1326
      %v1469 = vunpack.c.l.b16 %v1327
      %v1470 = vpack.c.b16 %v1463, %v1462
      %v1471 = vpack.c.b16 %v1465, %v1464
      %v1472 = vpack.c.b16 %v1467, %v1466
      %v1473 = vpack.c.b16 %v1469, %v1468
      %v1486 = vunpack.c.l.b16 %v1373
      %v1487 = vunpack.c.l.b16 %v1374
      %v1488 = vunpack.c.l.b16 %v1375
      %v1489 = vunpack.c.l.b16 %v1376
      %v1490 = vunpack.c.l.b16 %v1377
      %v1491 = vunpack.c.l.b16 %v1378
      %v1492 = vunpack.c.l.b16 %v1379
      %v1493 = vunpack.c.l.b16 %v1380
      %v1494 = vpack.c.b16 %v1487, %v1486
      %v1495 = vpack.c.b16 %v1489, %v1488
      %v1496 = vpack.c.b16 %v1491, %v1490
      %v1497 = vpack.c.b16 %v1493, %v1492
      %v1550 = vunpack.c.l.b16 %v1382
      %v1551 = vunpack.c.l.b16 %v1383
      %v1552 = vunpack.c.l.b16 %v1384
      %v1553 = vunpack.c.l.b16 %v1385
      %v1554 = vunpack.c.l.b16 %v1386
      %v1555 = vunpack.c.l.b16 %v1387
      %v1556 = vunpack.c.l.b16 %v1388
      %v1557 = vunpack.c.l.b16 %v1389
      %v1558 = vunpack.c.l.b16 %v1390
      %v1559 = vunpack.c.l.b16 %v1391
      %v1560 = vunpack.c.l.b16 %v1392
      %v1561 = vunpack.c.l.b16 %v1393
      %v1562 = vunpack.c.l.b16 %v1394
      %v1563 = vunpack.c.l.b16 %v1395
      %v1564 = vunpack.c.l.b16 %v1396
      %v1565 = vunpack.c.l.b16 %v1397
      %v1566 = vunpack.c.l.b16 %v1398
      %v1567 = vunpack.c.l.b16 %v1399
      %v1568 = vunpack.c.l.b16 %v1400
      %v1569 = vunpack.c.l.b16 %v1401
      %v1570 = vunpack.c.l.b16 %v1402
      %v1571 = vunpack.c.l.b16 %v1403
      %v1572 = vunpack.c.l.b16 %v1404
      %v1573 = vunpack.c.l.b16 %v1405
      %v1574 = vunpack.c.l.b16 %v1406
      %v1575 = vunpack.c.l.b16 %v1407
      %v1576 = vunpack.c.l.b16 %v1408
      %v1577 = vunpack.c.l.b16 %v1409
      %v1578 = vunpack.c.l.b16 %v1410
      %v1579 = vunpack.c.l.b16 %v1411
      %v1580 = vunpack.c.l.b16 %v1412
      %v1581 = vunpack.c.l.b16 %v1413
      %v1582 = vunpack.c.l.b16 %v1414
      %v1583 = vunpack.c.l.b16 %v1415
      %v1584 = vunpack.c.l.b16 %v1416
      %v1585 = vunpack.c.l.b16 %v1417
      %v1586 = vunpack.c.l.b16 %v1418
      %v1587 = vunpack.c.l.b16 %v1419
      %v1588 = vunpack.c.l.b16 %v1420
      %v1589 = vunpack.c.l.b16 %v1421
      %v1590 = vunpack.c.l.b16 %v1422
      %v1591 = vunpack.c.l.b16 %v1423
      %v1592 = vunpack.c.l.b16 %v1424
      %v1593 = vunpack.c.l.b16 %v1425
      %v1594 = vunpack.c.l.b16 %v1426
      %v1595 = vunpack.c.l.b16 %v1427
      %v1596 = vunpack.c.l.b16 %v1428
      %v1597 = vunpack.c.l.b16 %v1429
      %v1598 = vpack.c.b16 %v1551, %v1550
      %v1599 = vpack.c.b16 %v1553, %v1552
      %v1600 = vpack.c.b16 %v1555, %v1554
      %v1601 = vpack.c.b16 %v1557, %v1556
      %v1602 = vpack.c.b16 %v1559, %v1558
      %v1603 = vpack.c.b16 %v1561, %v1560
      %v1604 = vpack.c.b16 %v1563, %v1562
      %v1605 = vpack.c.b16 %v1565, %v1564
      %v1606 = vpack.c.b16 %v1567, %v1566
      %v1607 = vpack.c.b16 %v1569, %v1568
      %v1608 = vpack.c.b16 %v1571, %v1570
      %v1609 = vpack.c.b16 %v1573, %v1572
      %v1610 = vpack.c.b16 %v1575, %v1574
      %v1611 = vpack.c.b16 %v1577, %v1576
      %v1612 = vpack.c.b16 %v1579, %v1578
      %v1613 = vpack.c.b16 %v1581, %v1580
      %v1614 = vpack.c.b16 %v1583, %v1582
      %v1615 = vpack.c.b16 %v1585, %v1584
      %v1616 = vpack.c.b16 %v1587, %v1586
      %v1617 = vpack.c.b16 %v1589, %v1588
      %v1618 = vpack.c.b16 %v1591, %v1590
      %v1619 = vpack.c.b16 %v1593, %v1592
      %v1620 = vpack.c.b16 %v1595, %v1594
      %v1621 = vpack.c.b16 %v1597, %v1596
      %1646 = vmatpush.bf16.msra.mxu0 %v1605
      %1647 = vmatpush.bf16.msra.mxu0 %v1604
      %1648 = vmatpush.bf16.msra.mxu0 %v1603
      %1649 = vmatpush.bf16.msra.mxu0 %v1602
      %1650 = vmatpush.bf16.msra.mxu0 %v1601
      %1651 = vmatpush.bf16.msra.mxu0 %v1600
      %1652 = vmatpush.bf16.msra.mxu0 %v1599
      %1653 = vmatpush.bf16.msra.mxu0 %v1598
      %1654 = vmatmul.bf16.gmra.mxu0 %v1446
      %v1655 = vpop.f32.mrf.mxu0
      %v1656 = vadd.f32 0.0, %v1655
      %v1657 = vpop.f32.mrf.mxu0
      %v1658 = vadd.f32 0.0, %v1657
      %1659 = vmatmul.bf16.gmra.mxu0 %v1447
      %v1660 = vpop.f32.mrf.mxu0
      %v1661 = vadd.f32 0.0, %v1660
      %v1662 = vpop.f32.mrf.mxu0
      %v1663 = vadd.f32 0.0, %v1662
      %1664 = vmatmul.bf16.gmra.mxu0 %v1448
      %v1665 = vpop.f32.mrf.mxu0
      %v1666 = vadd.f32 0.0, %v1665
      %v1667 = vpop.f32.mrf.mxu0
      %v1668 = vadd.f32 0.0, %v1667
      %1669 = vmatmul.bf16.gmra.mxu0 %v1449
      %v1670 = vpop.f32.mrf.mxu0
      %v1671 = vadd.f32 0.0, %v1670
      %v1672 = vpop.f32.mrf.mxu0
      %v1673 = vadd.f32 0.0, %v1672
      %1674 = vdwg.mxu0
      %1675 = vmatpush.bf16.msra.mxu0 %v1613
      %1676 = vmatpush.bf16.msra.mxu0 %v1612
      %1677 = vmatpush.bf16.msra.mxu0 %v1611
      %1678 = vmatpush.bf16.msra.mxu0 %v1610
      %1679 = vmatpush.bf16.msra.mxu0 %v1609
      %1680 = vmatpush.bf16.msra.mxu0 %v1608
      %1681 = vmatpush.bf16.msra.mxu0 %v1607
      %1682 = vmatpush.bf16.msra.mxu0 %v1606
      %1683 = vmatmul.bf16.gmra.mxu0 %v1470
      %v1684 = vpop.f32.mrf.mxu0
      %v1685 = vadd.f32 %v1656, %v1684
      %v1686 = vpop.f32.mrf.mxu0
      %v1687 = vadd.f32 %v1658, %v1686
      %1688 = vmatmul.bf16.gmra.mxu0 %v1471
      %v1689 = vpop.f32.mrf.mxu0
      %v1690 = vadd.f32 %v1661, %v1689
      %v1691 = vpop.f32.mrf.mxu0
      %v1692 = vadd.f32 %v1663, %v1691
      %1693 = vmatmul.bf16.gmra.mxu0 %v1472
      %v1694 = vpop.f32.mrf.mxu0
      %v1695 = vadd.f32 %v1666, %v1694
      %v1696 = vpop.f32.mrf.mxu0
      %v1697 = vadd.f32 %v1668, %v1696
      %1698 = vmatmul.bf16.gmra.mxu0 %v1473
      %v1699 = vpop.f32.mrf.mxu0
      %v1700 = vadd.f32 %v1671, %v1699
      %v1701 = vpop.f32.mrf.mxu0
      %v1702 = vadd.f32 %v1673, %v1701
      %1703 = vdwg.mxu0
      %1704 = vmatpush.bf16.msra.mxu0 %v1621
      %1705 = vmatpush.bf16.msra.mxu0 %v1620
      %1706 = vmatpush.bf16.msra.mxu0 %v1619
      %1707 = vmatpush.bf16.msra.mxu0 %v1618
      %1708 = vmatpush.bf16.msra.mxu0 %v1617
      %1709 = vmatpush.bf16.msra.mxu0 %v1616
      %1710 = vmatpush.bf16.msra.mxu0 %v1615
      %1711 = vmatpush.bf16.msra.mxu0 %v1614
      %1712 = vmatmul.bf16.gmra.mxu0 %v1494
      %v1713 = vpop.f32.mrf.mxu0
      %v1714 = vadd.f32 %v1685, %v1713
      %v1715 = vpop.f32.mrf.mxu0
      %v1716 = vadd.f32 %v1687, %v1715
      %1717 = vmatmul.bf16.gmra.mxu0 %v1495
      %v1718 = vpop.f32.mrf.mxu0
      %v1719 = vadd.f32 %v1690, %v1718
      %v1720 = vpop.f32.mrf.mxu0
      %v1721 = vadd.f32 %v1692, %v1720
      %1722 = vmatmul.bf16.gmra.mxu0 %v1496
      %v1723 = vpop.f32.mrf.mxu0
      %v1724 = vadd.f32 %v1695, %v1723
      %v1725 = vpop.f32.mrf.mxu0
      %v1726 = vadd.f32 %v1697, %v1725
      %1727 = vmatmul.bf16.gmra.mxu0 %v1497
      %v1728 = vpop.f32.mrf.mxu0
      %v1729 = vadd.f32 %v1700, %v1728
      %v1730 = vpop.f32.mrf.mxu0
      %v1731 = vadd.f32 %v1702, %v1730
      %1732 = vdwg.mxu0
      %s1733 = scalar_lea.vmem %s2, 4
      %v1734 = vld [vmem:[%s1733] sm:$0x1]
      %v1736 = vperm.slane %v1734, 0
      %v1738 = vmul.f32 %v1714, %v1736
      %v1739 = vmul.f32 %v1716, %v1736
      %v1740 = vmul.f32 %v1719, %v1736
      %v1741 = vmul.f32 %v1721, %v1736
      %v1742 = vmul.f32 %v1724, %v1736
      %v1743 = vmul.f32 %v1726, %v1736
      %v1744 = vmul.f32 %v1729, %v1736
      %v1745 = vmul.f32 %v1731, %v1736
      %s1746 = scalar_lea.vmem %s2, 5
      %v1747 = vld [vmem:[%s1746] sm:$0x1]
      %v1749 = vperm.slane %v1747, 0
      %v1751 = vadd.f32 %v1738, %v1749
      %v1752 = vadd.f32 %v1739, %v1749
      %v1753 = vadd.f32 %v1740, %v1749
      %v1754 = vadd.f32 %v1741, %v1749
      %v1755 = vadd.f32 %v1742, %v1749
      %v1756 = vadd.f32 %v1743, %v1749
      %v1757 = vadd.f32 %v1744, %v1749
      %v1758 = vadd.f32 %v1745, %v1749
      %v1759 = vmax.f32 %v1751, 0.0
      %v1760 = vmax.f32 %v1752, 0.0
      %v1761 = vmax.f32 %v1753, 0.0
      %v1762 = vmax.f32 %v1754, 0.0
      %v1763 = vmax.f32 %v1755, 0.0
      %v1764 = vmax.f32 %v1756, 0.0
      %v1765 = vmax.f32 %v1757, 0.0
      %v1766 = vmax.f32 %v1758, 0.0
      %v1767 = vpack.c.bf16 %v1759, %v1759
      %v1768 = vpack.c.bf16 %v1760, %v1760
      %v1769 = vpack.c.bf16 %v1761, %v1761
      %v1770 = vpack.c.bf16 %v1762, %v1762
      %v1771 = vpack.c.bf16 %v1763, %v1763
      %v1772 = vpack.c.bf16 %v1764, %v1764
      %v1773 = vpack.c.bf16 %v1765, %v1765
      %v1774 = vpack.c.bf16 %v1766, %v1766
      %s1775 = scalar_lea.vmem %s1, 576
      %v1776 = vld [vmem:[%s1775] sm:$0xf]
      %v1777 = vld [vmem:[%s1775 + $0x4] sm:$0xf]
      %v1778 = vld [vmem:[%s1775 + $0x8] sm:$0xf]
      %v1779 = vld [vmem:[%s1775 + $0xc] sm:$0xf]
      %v1780 = vld [vmem:[%s1775 + $0x10] sm:$0xf]
      %v1781 = vld [vmem:[%s1775 + $0x14] sm:$0xf]
      %v1782 = vld [vmem:[%s1775 + $0x18] sm:$0xf]
      %v1783 = vld [vmem:[%s1775 + $0x1c] sm:$0xf]
      %v1784 = vld [vmem:[%s1775 + $0x20] sm:$0xf]
      %v1785 = vld [vmem:[%s1775 + $0x24] sm:$0xf]
      %v1786 = vld [vmem:[%s1775 + $0x28] sm:$0xf]
      %v1787 = vld [vmem:[%s1775 + $0x2c] sm:$0xf]
      %v1788 = vld [vmem:[%s1775 + $0x30] sm:$0xf]
      %v1789 = vld [vmem:[%s1775 + $0x34] sm:$0xf]
      %v1790 = vld [vmem:[%s1775 + $0x38] sm:$0xf]
      %v1791 = vld [vmem:[%s1775 + $0x3c] sm:$0xf]
      %v1792 = vld [vmem:[%s1775 + $0x40] sm:$0xf]
      %v1793 = vld [vmem:[%s1775 + $0x44] sm:$0xf]
      %v1794 = vld [vmem:[%s1775 + $0x48] sm:$0xf]
      %v1795 = vld [vmem:[%s1775 + $0x4c] sm:$0xf]
      %v1796 = vld [vmem:[%s1775 + $0x50] sm:$0xf]
      %v1797 = vld [vmem:[%s1775 + $0x54] sm:$0xf]
      %v1798 = vld [vmem:[%s1775 + $0x58] sm:$0xf]
      %v1799 = vld [vmem:[%s1775 + $0x5c] sm:$0xf]
      %v1800 = vld [vmem:[%s1775 + $0x60] sm:$0xf]
      %v1801 = vld [vmem:[%s1775 + $0x64] sm:$0xf]
      %v1802 = vld [vmem:[%s1775 + $0x68] sm:$0xf]
      %v1803 = vld [vmem:[%s1775 + $0x6c] sm:$0xf]
      %v1804 = vld [vmem:[%s1775 + $0x70] sm:$0xf]
      %v1805 = vld [vmem:[%s1775 + $0x74] sm:$0xf]
      %v1806 = vld [vmem:[%s1775 + $0x78] sm:$0xf]
      %v1807 = vld [vmem:[%s1775 + $0x7c] sm:$0xf]
      %v1808 = vld [vmem:[%s1775 + $0x80] sm:$0xf]
      %v1809 = vld [vmem:[%s1775 + $0x84] sm:$0xf]
      %v1810 = vld [vmem:[%s1775 + $0x88] sm:$0xf]
      %v1811 = vld [vmem:[%s1775 + $0x8c] sm:$0xf]
      %v1812 = vld [vmem:[%s1775 + $0x90] sm:$0xf]
      %v1813 = vld [vmem:[%s1775 + $0x94] sm:$0xf]
      %v1814 = vld [vmem:[%s1775 + $0x98] sm:$0xf]
      %v1815 = vld [vmem:[%s1775 + $0x9c] sm:$0xf]
      %v1816 = vld [vmem:[%s1775 + $0xa0] sm:$0xf]
      %v1817 = vld [vmem:[%s1775 + $0xa4] sm:$0xf]
      %v1818 = vld [vmem:[%s1775 + $0xa8] sm:$0xf]
      %v1819 = vld [vmem:[%s1775 + $0xac] sm:$0xf]
      %v1820 = vld [vmem:[%s1775 + $0xb0] sm:$0xf]
      %v1821 = vld [vmem:[%s1775 + $0xb4] sm:$0xf]
      %v1822 = vld [vmem:[%s1775 + $0xb8] sm:$0xf]
      %v1823 = vld [vmem:[%s1775 + $0xbc] sm:$0xf]
      %v1832 = vunpack.c.l.b16 %v1767
      %v1833 = vunpack.c.l.b16 %v1768
      %v1834 = vunpack.c.l.b16 %v1769
      %v1835 = vunpack.c.l.b16 %v1770
      %v1836 = vunpack.c.l.b16 %v1771
      %v1837 = vunpack.c.l.b16 %v1772
      %v1838 = vunpack.c.l.b16 %v1773
      %v1839 = vunpack.c.l.b16 %v1774
      %v1840 = vpack.c.b16 %v1833, %v1832
      %v1841 = vpack.c.b16 %v1835, %v1834
      %v1842 = vpack.c.b16 %v1837, %v1836
      %v1843 = vpack.c.b16 %v1839, %v1838
      %v1844 = vrot.slane %v1840, 7
      %v1845 = vrot.slane %v1841, 7
      %v1846 = vrot.slane %v1842, 7
      %v1847 = vrot.slane %v1843, 7
      %vm1848 = vcmask 1040384
      %v1851 = vsel %vm1848, 0, %v1844
      %v1854 = vsel %vm1848, 0, %v1845
      %v1857 = vsel %vm1848, 0, %v1846
      %v1860 = vsel %vm1848, 0, %v1847
      %v1862 = vrot.slane %v1840, 1
      %v1863 = vrot.slane %v1841, 1
      %v1864 = vrot.slane %v1842, 1
      %v1865 = vrot.slane %v1843, 1
      %vm1866 = vcmask 1046528
      %v1868 = vsel %vm1866, %v1862, 0
      %v1871 = vsel %vm1866, %v1863, 0
      %v1874 = vsel %vm1866, %v1864, 0
      %v1877 = vsel %vm1866, %v1865, 0
      %v1931 = vunpack.c.l.b16 %v1776
      %v1932 = vunpack.c.l.b16 %v1777
      %v1933 = vunpack.c.l.b16 %v1778
      %v1934 = vunpack.c.l.b16 %v1779
      %v1935 = vunpack.c.l.b16 %v1780
      %v1936 = vunpack.c.l.b16 %v1781
      %v1937 = vunpack.c.l.b16 %v1782
      %v1938 = vunpack.c.l.b16 %v1783
      %v1939 = vunpack.c.l.b16 %v1784
      %v1940 = vunpack.c.l.b16 %v1785
      %v1941 = vunpack.c.l.b16 %v1786
      %v1942 = vunpack.c.l.b16 %v1787
      %v1943 = vunpack.c.l.b16 %v1788
      %v1944 = vunpack.c.l.b16 %v1789
      %v1945 = vunpack.c.l.b16 %v1790
      %v1946 = vunpack.c.l.b16 %v1791
      %v1947 = vunpack.c.l.b16 %v1792
      %v1948 = vunpack.c.l.b16 %v1793
      %v1949 = vunpack.c.l.b16 %v1794
      %v1950 = vunpack.c.l.b16 %v1795
      %v1951 = vunpack.c.l.b16 %v1796
      %v1952 = vunpack.c.l.b16 %v1797
      %v1953 = vunpack.c.l.b16 %v1798
      %v1954 = vunpack.c.l.b16 %v1799
      %v1955 = vunpack.c.l.b16 %v1800
      %v1956 = vunpack.c.l.b16 %v1801
      %v1957 = vunpack.c.l.b16 %v1802
      %v1958 = vunpack.c.l.b16 %v1803
      %v1959 = vunpack.c.l.b16 %v1804
      %v1960 = vunpack.c.l.b16 %v1805
      %v1961 = vunpack.c.l.b16 %v1806
      %v1962 = vunpack.c.l.b16 %v1807
      %v1963 = vunpack.c.l.b16 %v1808
      %v1964 = vunpack.c.l.b16 %v1809
      %v1965 = vunpack.c.l.b16 %v1810
      %v1966 = vunpack.c.l.b16 %v1811
      %v1967 = vunpack.c.l.b16 %v1812
      %v1968 = vunpack.c.l.b16 %v1813
      %v1969 = vunpack.c.l.b16 %v1814
      %v1970 = vunpack.c.l.b16 %v1815
      %v1971 = vunpack.c.l.b16 %v1816
      %v1972 = vunpack.c.l.b16 %v1817
      %v1973 = vunpack.c.l.b16 %v1818
      %v1974 = vunpack.c.l.b16 %v1819
      %v1975 = vunpack.c.l.b16 %v1820
      %v1976 = vunpack.c.l.b16 %v1821
      %v1977 = vunpack.c.l.b16 %v1822
      %v1978 = vunpack.c.l.b16 %v1823
      %v1979 = vpack.c.b16 %v1932, %v1931
      %v1980 = vpack.c.b16 %v1934, %v1933
      %v1981 = vpack.c.b16 %v1936, %v1935
      %v1982 = vpack.c.b16 %v1938, %v1937
      %v1983 = vpack.c.b16 %v1940, %v1939
      %v1984 = vpack.c.b16 %v1942, %v1941
      %v1985 = vpack.c.b16 %v1944, %v1943
      %v1986 = vpack.c.b16 %v1946, %v1945
      %v1987 = vpack.c.b16 %v1948, %v1947
      %v1988 = vpack.c.b16 %v1950, %v1949
      %v1989 = vpack.c.b16 %v1952, %v1951
      %v1990 = vpack.c.b16 %v1954, %v1953
      %v1991 = vpack.c.b16 %v1956, %v1955
      %v1992 = vpack.c.b16 %v1958, %v1957
      %v1993 = vpack.c.b16 %v1960, %v1959
      %v1994 = vpack.c.b16 %v1962, %v1961
      %v1995 = vpack.c.b16 %v1964, %v1963
      %v1996 = vpack.c.b16 %v1966, %v1965
      %v1997 = vpack.c.b16 %v1968, %v1967
      %v1998 = vpack.c.b16 %v1970, %v1969
      %v1999 = vpack.c.b16 %v1972, %v1971
      %v2000 = vpack.c.b16 %v1974, %v1973
      %v2001 = vpack.c.b16 %v1976, %v1975
      %v2002 = vpack.c.b16 %v1978, %v1977
      %2027 = vmatpush.bf16.msra.mxu0 %v1986
      %2028 = vmatpush.bf16.msra.mxu0 %v1985
      %2029 = vmatpush.bf16.msra.mxu0 %v1984
      %2030 = vmatpush.bf16.msra.mxu0 %v1983
      %2031 = vmatpush.bf16.msra.mxu0 %v1982
      %2032 = vmatpush.bf16.msra.mxu0 %v1981
      %2033 = vmatpush.bf16.msra.mxu0 %v1980
      %2034 = vmatpush.bf16.msra.mxu0 %v1979
      %2035 = vmatmul.bf16.gmra.mxu0 %v1851
      %v2036 = vpop.f32.mrf.mxu0
      %v2037 = vadd.f32 0.0, %v2036
      %v2038 = vpop.f32.mrf.mxu0
      %v2039 = vadd.f32 0.0, %v2038
      %2040 = vmatmul.bf16.gmra.mxu0 %v1854
      %v2041 = vpop.f32.mrf.mxu0
      %v2042 = vadd.f32 0.0, %v2041
      %v2043 = vpop.f32.mrf.mxu0
      %v2044 = vadd.f32 0.0, %v2043
      %2045 = vmatmul.bf16.gmra.mxu0 %v1857
      %v2046 = vpop.f32.mrf.mxu0
      %v2047 = vadd.f32 0.0, %v2046
      %v2048 = vpop.f32.mrf.mxu0
      %v2049 = vadd.f32 0.0, %v2048
      %2050 = vmatmul.bf16.gmra.mxu0 %v1860
      %v2051 = vpop.f32.mrf.mxu0
      %v2052 = vadd.f32 0.0, %v2051
      %v2053 = vpop.f32.mrf.mxu0
      %v2054 = vadd.f32 0.0, %v2053
      %2055 = vdwg.mxu0
      %2056 = vmatpush.bf16.msra.mxu0 %v1994
      %2057 = vmatpush.bf16.msra.mxu0 %v1993
      %2058 = vmatpush.bf16.msra.mxu0 %v1992
      %2059 = vmatpush.bf16.msra.mxu0 %v1991
      %2060 = vmatpush.bf16.msra.mxu0 %v1990
      %2061 = vmatpush.bf16.msra.mxu0 %v1989
      %2062 = vmatpush.bf16.msra.mxu0 %v1988
      %2063 = vmatpush.bf16.msra.mxu0 %v1987
      %2064 = vmatmul.bf16.gmra.mxu0 %v1840
      %v2065 = vpop.f32.mrf.mxu0
      %v2066 = vadd.f32 %v2037, %v2065
      %v2067 = vpop.f32.mrf.mxu0
      %v2068 = vadd.f32 %v2039, %v2067
      %2069 = vmatmul.bf16.gmra.mxu0 %v1841
      %v2070 = vpop.f32.mrf.mxu0
      %v2071 = vadd.f32 %v2042, %v2070
      %v2072 = vpop.f32.mrf.mxu0
      %v2073 = vadd.f32 %v2044, %v2072
      %2074 = vmatmul.bf16.gmra.mxu0 %v1842
      %v2075 = vpop.f32.mrf.mxu0
      %v2076 = vadd.f32 %v2047, %v2075
      %v2077 = vpop.f32.mrf.mxu0
      %v2078 = vadd.f32 %v2049, %v2077
      %2079 = vmatmul.bf16.gmra.mxu0 %v1843
      %v2080 = vpop.f32.mrf.mxu0
      %v2081 = vadd.f32 %v2052, %v2080
      %v2082 = vpop.f32.mrf.mxu0
      %v2083 = vadd.f32 %v2054, %v2082
      %2084 = vdwg.mxu0
      %2085 = vmatpush.bf16.msra.mxu0 %v2002
      %2086 = vmatpush.bf16.msra.mxu0 %v2001
      %2087 = vmatpush.bf16.msra.mxu0 %v2000
      %2088 = vmatpush.bf16.msra.mxu0 %v1999
      %2089 = vmatpush.bf16.msra.mxu0 %v1998
      %2090 = vmatpush.bf16.msra.mxu0 %v1997
      %2091 = vmatpush.bf16.msra.mxu0 %v1996
      %2092 = vmatpush.bf16.msra.mxu0 %v1995
      %2093 = vmatmul.bf16.gmra.mxu0 %v1868
      %v2094 = vpop.f32.mrf.mxu0
      %v2095 = vadd.f32 %v2066, %v2094
      %v2096 = vpop.f32.mrf.mxu0
      %v2097 = vadd.f32 %v2068, %v2096
      %2098 = vmatmul.bf16.gmra.mxu0 %v1871
      %v2099 = vpop.f32.mrf.mxu0
      %v2100 = vadd.f32 %v2071, %v2099
      %v2101 = vpop.f32.mrf.mxu0
      %v2102 = vadd.f32 %v2073, %v2101
      %2103 = vmatmul.bf16.gmra.mxu0 %v1874
      %v2104 = vpop.f32.mrf.mxu0
      %v2105 = vadd.f32 %v2076, %v2104
      %v2106 = vpop.f32.mrf.mxu0
      %v2107 = vadd.f32 %v2078, %v2106
      %2108 = vmatmul.bf16.gmra.mxu0 %v1877
      %v2109 = vpop.f32.mrf.mxu0
      %v2110 = vadd.f32 %v2081, %v2109
      %v2111 = vpop.f32.mrf.mxu0
      %v2112 = vadd.f32 %v2083, %v2111
      %2113 = vdwg.mxu0
      %v2114 = vunpack.c.l.bf16 %v274
      %v2115 = vunpack.c.l.bf16 %v275
      %v2116 = vunpack.c.l.bf16 %v276
      %v2117 = vunpack.c.l.bf16 %v277
      %v2118 = vunpack.c.l.bf16 %v278
      %v2119 = vunpack.c.l.bf16 %v279
      %v2120 = vunpack.c.l.bf16 %v280
      %v2121 = vunpack.c.l.bf16 %v281
      %v2122 = vadd.f32 %v2095, %v2114
      %v2123 = vadd.f32 %v2097, %v2115
      %v2124 = vadd.f32 %v2100, %v2116
      %v2125 = vadd.f32 %v2102, %v2117
      %v2126 = vadd.f32 %v2105, %v2118
      %v2127 = vadd.f32 %v2107, %v2119
      %v2128 = vadd.f32 %v2110, %v2120
      %v2129 = vadd.f32 %v2112, %v2121
      %s2130 = scalar_lea.vmem %s2, 6
      %v2131 = vld [vmem:[%s2130] sm:$0x1]
      %v2133 = vperm.slane %v2131, 0
      %v2135 = vmul.f32 %v2122, %v2133
      %v2136 = vmul.f32 %v2123, %v2133
      %v2137 = vmul.f32 %v2124, %v2133
      %v2138 = vmul.f32 %v2125, %v2133
      %v2139 = vmul.f32 %v2126, %v2133
      %v2140 = vmul.f32 %v2127, %v2133
      %v2141 = vmul.f32 %v2128, %v2133
      %v2142 = vmul.f32 %v2129, %v2133
      %s2143 = scalar_lea.vmem %s2, 7
      %v2144 = vld [vmem:[%s2143] sm:$0x1]
      %v2146 = vperm.slane %v2144, 0
      %v2148 = vadd.f32 %v2135, %v2146
      %v2149 = vadd.f32 %v2136, %v2146
      %v2150 = vadd.f32 %v2137, %v2146
      %v2151 = vadd.f32 %v2138, %v2146
      %v2152 = vadd.f32 %v2139, %v2146
      %v2153 = vadd.f32 %v2140, %v2146
      %v2154 = vadd.f32 %v2141, %v2146
      %v2155 = vadd.f32 %v2142, %v2146
      %v2156 = vmax.f32 %v2148, 0.0
      %v2157 = vmax.f32 %v2149, 0.0
      %v2158 = vmax.f32 %v2150, 0.0
      %v2159 = vmax.f32 %v2151, 0.0
      %v2160 = vmax.f32 %v2152, 0.0
      %v2161 = vmax.f32 %v2153, 0.0
      %v2162 = vmax.f32 %v2154, 0.0
      %v2163 = vmax.f32 %v2155, 0.0
      %2164 = vst [vmem:[%s148] sm:$0xff] %v2156
      %2165 = vst [vmem:[%s148 + $0x8] sm:$0xff] %v2157
      %2166 = vst [vmem:[%s148 + $0x10] sm:$0xff] %v2158
      %2167 = vst [vmem:[%s148 + $0x18] sm:$0xff] %v2159
      %2168 = vst [vmem:[%s148 + $0x20] sm:$0xff] %v2160
      %2169 = vst [vmem:[%s148 + $0x28] sm:$0xff] %v2161
      %2170 = vst [vmem:[%s148 + $0x30] sm:$0xff] %v2162
      %2171 = vst [vmem:[%s148 + $0x38] sm:$0xff] %v2163
      %s2172 = smul.u32 4, %s19
      %p2173 = scmp.lt.s32.totalorder %s18, 1
      %s2174 = scalar_select %p2173, %s18, 1
      %p2175 = scmp.lt.s32.totalorder %s2172, 15
      %s2176 = scalar_select %p2175, %s2172, 15
      %s2177 = smul.addr %s2176, 2
      %s2178 = smul.addr %s2174, 32
      %s2179 = sadd.s32 %s2177, %s2178
      %s2180 = smul.addr %s2179, 8
      %s2181 = scalar_lea.vmem %s3, %s2180
      // Predicated region
      $region75: #{non_bt1d_block.1} parent=27 // pred_check
        %p2182 = pneg %p88
      $region76: #{non_bt1d_block.1} parent=27 // pred_check_branch
        %2184 = sbr.rel (%p2182) target = $region78
      $region77: #{non_bt1d_block.1} parent=27 // pred_region
        %s2185 = smul.u32 4, %s19
      $region78: #{non_bt1d_block.1} parent=27 // pred_fallthru
        _
    $region28: #{non_bt1d_block.1} parent=5 // pred_fallthru
      _
    %p2186 = scmp.le.s32.totalorder 2, %s9
    // Predicated region
    $region79: #{non_bt1d_block.1} parent=5 // pred_check
      %p2187 = pneg %p2186
    $region80: #{non_bt1d_block.1} parent=5 // pred_check_branch
      %2189 = sbr.rel (%p2187) target = $region82
    $region81: #{non_bt1d_block.1} parent=5 // pred_region
      %s2190 = ssub.s32 %s9, 2
      // Predicated region
      $region83: #{non_bt1d_block.1} parent=81 // pred_check
        %p2191 = pneg %p94
      $region84: #{non_bt1d_block.1} parent=81 // pred_check_branch
        %2193 = sbr.rel (%p2191) target = $region86
      $region85: #{non_bt1d_block.1} parent=81 // pred_region
        %s2194 = smul.u32 4, %s21
        %p2195 = scmp.lt.s32.totalorder %s20, 1
        %s2196 = scalar_select %p2195, %s20, 1
        %p2197 = scmp.lt.s32.totalorder %s2194, 15
        %s2198 = scalar_select %p2197, %s2194, 15
        %s2199 = smul.addr %s2198, 2
        %s2200 = smul.addr %s2196, 32
        %s2201 = sadd.s32 %s2199, %s2200
        %s2202 = smul.addr %s2201, 8
        %s2203 = scalar_lea.vmem %s3, %s2202
      $region86: #{non_bt1d_block.1} parent=81 // pred_fallthru
        _
    $region82: #{non_bt1d_block.1} parent=5 // pred_fallthru
      _
  $region6: #{non_bt1d_block.1} parent=0 // loop_footer
    %s13 = sadd.s32 1, %s9
  $region7: #{non_bt1d_block.1} parent=0 // loop_footer_branch
    %8 = sbr.rel target = $region3
  $region8: #{non_bt1d_block.1} parent=0 // loop_exit
    _
  %2204 = vsyncmov [#allocation3]
  %s2205 = vpop.sfrf %2204
  %p2206 = scmp.eq.s32.totalorder %s2205, 0
  %p2207 = pneg %p2206
  %2209 = shalt.err (%p2207)
  %s2210 = scalar_lea.sflag [#allocation3], 1
  %2211 = vsyncmov %s2210
  %s2212 = vpop.sfrf %2211
  %p2213 = scmp.eq.s32.totalorder %s2212, 0
  %p2214 = pneg %p2213
  %2216 = shalt.err (%p2214)

</llo_original>
